<compile_context>
chip_gen: v5e
topology: v5e:2x2
jax: 0.10.0
libtpu: 0.0.40
codegen_flags: <defaults>
</compile_context>

<pallas_src>
import functools

import jax
import jax.numpy as jnp
from jax import lax
from jax.experimental import pallas as pl
from jax.experimental.pallas import tpu as pltpu


# ----------------------------------------------------------------------------
# Fused agglomeration kernel: one grid step == one batch element, the full
# n-1 merge loop runs inside the kernel on VMEM-resident buffers.
# ----------------------------------------------------------------------------
def _agg_fused_kernel(x_ref, p_ref, o_ref, buf_ref, mrow_ref, mcol_ref, *, n, imax):
    """x_ref:(n,cwh)  p_ref:(3,cwh)  o_ref:(1,cwh)
       buf_ref:(imax,cwh)  mrow_ref:(imax,1)  mcol_ref:(1,imax),  imax = 2n-1."""
    cwh = buf_ref.shape[1]
    inf = jnp.float32(jnp.inf)

    riota = lax.broadcasted_iota(jnp.int32, (imax, 1), 0)      # row ids (sublane)
    ciota = lax.broadcasted_iota(jnp.int32, (1, imax), 1)      # col ids (lane)
    row = lax.broadcasted_iota(jnp.int32, (imax, imax), 0)
    col = lax.broadcasted_iota(jnp.int32, (imax, imax), 1)

    # Per-grid-step (per-batch) init of the resident buffers.
    buf_ref[...] = jnp.zeros((imax, cwh), jnp.float32)
    buf_ref[0:n, :] = x_ref[...]
    mrow_ref[...] = jnp.where(riota < n, 0.0, inf).astype(jnp.float32)
    mcol_ref[...] = jnp.where(ciota < n, 0.0, inf).astype(jnp.float32)

    p = p_ref[...]                       # (3, cwh): centre-tap weights + bias
    w_l = p[0:1, :]
    w_r = p[1:2, :]
    b = p[2:3, :]

    def merge_step(step, carry):
        t = buf_ref[...]                                           # (imax, cwh)

        # Pairwise squared distances, same expansion as the torch reference:
        # sq_i + sq_j - 2 * (t @ t.T).  One tiny f32 matmul per step.
        g = lax.dot_general(t, t, (((1,), (1,)), ((), ())),
                            preferred_element_type=jnp.float32)    # (imax, imax)
        diag = jnp.where(row == col, g, 0.0)
        sq_col = jnp.sum(diag, axis=1, keepdims=True)              # (imax, 1)
        sq_row = jnp.sum(diag, axis=0, keepdims=True)              # (1, imax)
        dist = sq_col + sq_row - 2.0 * g
        dist = jnp.where(row == col, inf, dist)                    # diag mask
        dist = dist + mrow_ref[...] + mcol_ref[...]                # dead/unused

        # Flattened argmin, first occurrence (row-major) -> (i, j).
        minval = jnp.min(jnp.min(dist, axis=1, keepdims=True), axis=0, keepdims=True)
        flat = row * imax + col
        cand = jnp.where(dist == minval, flat, imax * imax)
        best = jnp.min(jnp.min(cand, axis=1, keepdims=True), axis=0, keepdims=True)
        sel = cand == best                                         # single True cell
        i_idx = jnp.min(jnp.min(jnp.where(sel, row, imax), axis=1, keepdims=True),
                        axis=0, keepdims=True)                     # (1, 1) int32
        j_idx = jnp.min(jnp.min(jnp.where(sel, col, imax), axis=1, keepdims=True),
                        axis=0, keepdims=True)                     # (1, 1) int32

        # Gather the two selected items without dynamic slicing.
        sel_i = riota == i_idx
        sel_j = riota == j_idx
        x_l = jnp.sum(jnp.where(sel_i, t, 0.0), axis=0, keepdims=True)   # (1, cwh)
        x_r = jnp.sum(jnp.where(sel_j, t, 0.0), axis=0, keepdims=True)   # (1, cwh)

        # Conv2d(2->1, 7x7, pad=3) on a 1x1 spatial map == centre-tap merge.
        new_row = x_l * w_l + x_r * w_r + b                        # (1, cwh)

        # Append new item, kill merged ones, enable the new slot.
        new_idx = n + step
        buf_ref[...] = jnp.where(riota == new_idx, new_row, t)
        mrow_ref[...] = jnp.where(sel_i | sel_j, inf,
                                  jnp.where(riota == new_idx, 0.0, mrow_ref[...]))
        mcol_ref[...] = jnp.where((ciota == i_idx) | (ciota == j_idx), inf,
                                  jnp.where(ciota == new_idx, 0.0, mcol_ref[...]))
        return carry

    lax.fori_loop(0, n - 1, merge_step, 0, unroll=True)
    o_ref[...] = buf_ref[imax - 1:imax, :]                         # final merged item


# ----------------------------------------------------------------------------
# Agg_666.forward
# ----------------------------------------------------------------------------
def agg_666_forward(x, weight, bias):
    """x:(batch,items,c,w,h), weight:(1,2,7,7), bias:(1,) -> (batch, c).
       Like the reference module, only w*h == 1 is supported."""
    batch, items, c, w, h = x.shape
    assert w == 1 and h == 1, "Agg_666's final reshape requires w * h == 1"
    # TODO(synk): general (w,h)>1 spatial 7x7 merge path is not implemented in
    # the fused kernel (the reference module's final reshape only type-checks
    # for w*h == 1 anyway).
    cwh = c * w * h
    n = items
    imax = 2 * n - 1

    t0 = x.reshape(batch, n, cwh).astype(jnp.float32)
    # Conv2d(2,1,7,pad=3) applied to a 1x1 map only touches the centre tap.
    scalars = jnp.stack([weight[0, 0, 3, 3],
                         weight[0, 1, 3, 3],
                         bias[0]]).astype(jnp.float32)              # (3,)
    params = jnp.broadcast_to(scalars[:, None], (3, cwh))           # lane-broadcast

    out = pl.pallas_call(
        functools.partial(_agg_fused_kernel, n=n, imax=imax),
        out_shape=jax.ShapeDtypeStruct((batch, 1, cwh), jnp.float32),
        grid=(batch,),
        in_specs=[
            pl.BlockSpec((None, n, cwh), lambda b: (b, 0, 0)),      # this batch's items
            pl.BlockSpec((3, cwh), lambda b: (0, 0)),               # merge params
        ],
        out_specs=pl.BlockSpec((None, 1, cwh), lambda b: (b, 0, 0)),
        scratch_shapes=[
            pltpu.VMEM((imax, cwh), jnp.float32),                   # item buffer
            pltpu.VMEM((imax, 1), jnp.float32),                     # row mask
            pltpu.VMEM((1, imax), jnp.float32),                     # col mask
        ],
        compiler_params=pltpu.CompilerParams(
            dimension_semantics=("parallel",)),                     # v7x: 2nd TC
    )(t0, params)
    return out.reshape(batch, c)


# ----------------------------------------------------------------------------
# Pure-JAX reference (mirrors the PyTorch module, uses a real 7x7 conv).
# ----------------------------------------------------------------------------
def _agg_666_reference(x, weight, bias):
    batch, items, c, w, h = x.shape
    cwh = c * w * h
    x = x.astype(jnp.float32)
    mask = jnp.zeros((batch, items), jnp.float32)
    n = items
    for _ in range(1, n):
        items = x.shape[1]
        t = x.reshape(batch, items, cwh)
        sq = jnp.sum(t * t, axis=2)
        dist = sq[:, :, None] + sq[:, None, :] - 2.0 * jnp.einsum("bid,bjd->bij", t, t)
        dist = dist + jnp.where(jnp.eye(items, dtype=bool), jnp.float32(jnp.inf), 0.0)
        dist = dist + mask[:, :, None] + mask[:, None, :]
        idx = jnp.argmin(dist.reshape(batch, items * items), axis=1)
        i_idx = idx // items
        j_idx = idx % items
        X_l = t[jnp.arange(batch), i_idx].reshape(batch, c, w, h)
        X_r = t[jnp.arange(batch), j_idx].reshape(batch, c, w, h)
        stack = jnp.stack([X_l, X_r], axis=2).reshape(batch * c, 2, w, h)
        conv = lax.conv_general_dilated(stack, weight.astype(jnp.float32), (1, 1),
                                        ((3, 3), (3, 3)),
                                        dimension_numbers=("NCHW", "OIHW", "NCHW"))
        conv = conv + bias.astype(jnp.float32).reshape(1, 1, 1, 1)
        Xn = conv.reshape(batch, 1, c, w, h)
        x = jnp.concatenate([x, Xn], axis=1)
        mask = jnp.concatenate([mask, jnp.zeros((batch, 1), jnp.float32)], axis=1)
        col_ar = jnp.arange(mask.shape[1])[None, :]
        mask = jnp.where((col_ar == i_idx[:, None]) | (col_ar == j_idx[:, None]),
                         jnp.float32(jnp.inf), mask)
    return x[:, x.shape[1] - 1].reshape(batch, c)


if __name__ == "__main__":
    key = jax.random.PRNGKey(0)
    k1, k2, k3 = jax.random.split(key, 3)

    # Small shapes consistent with the module (final reshape forces w = h = 1).
    batch, items, c, w, h = 2, 6, 16, 1, 1
    x = jax.random.normal(k1, (batch, items, c, w, h), dtype=jnp.float32)

    # Deterministic Conv2d(2, 1, 7, padding=3) parameters.
    weight = jax.random.normal(k2, (1, 2, 7, 7), dtype=jnp.float32) * 0.1
    bias = jax.random.normal(k3, (1,), dtype=jnp.float32) * 0.1

    out = agg_666_forward(x, weight, bias)
    out = jax.block_until_ready(out)
    assert out.shape == (batch, c), out.shape

    ref = jax.block_until_ready(_agg_666_reference(x, weight, bias))
    assert jnp.allclose(out, ref, atol=1e-4, rtol=1e-4), (out, ref)

    print("KERNEL_OK")
</pallas_src>

<mosaic_0001>
module attributes {stable_mosaic.version = 11 : i64} {
  func.func @_agg_fused_kernel(%arg0: i32, %arg1: memref<1x6x16xf32, #tpu.memory_space<vmem>>, %arg2: memref<3x16xf32, #tpu.memory_space<vmem>>, %arg3: memref<1x1x16xf32, #tpu.memory_space<vmem>>, %arg4: memref<11x16xf32, #tpu.memory_space<vmem>>, %arg5: memref<11x1xf32, #tpu.memory_space<vmem>>, %arg6: memref<1x11xf32, #tpu.memory_space<vmem>>) attributes {dimension_semantics = [#tpu.dimension_semantics<parallel>], iteration_bounds = array<i64: 2>, scalar_prefetch = 0 : i64, scratch_operands = 3 : i64, tpu.core_type = #tpu.core_type<tc>, window_params = [{transform_indices = @transform_0, window_bounds = array<i64: 1, 6, 16>}, {pipeline_mode = #tpu.pipeline_mode<synchronous>, transform_indices = @transform_1, window_bounds = array<i64: 3, 16>}, {transform_indices = @transform_2, window_bounds = array<i64: 1, 1, 16>}]} {
    %0 = tpu.iota {dimensions = array<i32: 0>} : vector<11x1xi32>
    %1 = tpu.iota {dimensions = array<i32: 1>} : vector<1x11xi32>
    %2 = tpu.iota {dimensions = array<i32: 0>} : vector<11x11xi32>
    %3 = tpu.iota {dimensions = array<i32: 1>} : vector<11x11xi32>
    %cst = arith.constant 0.000000e+00 : f32
    %4 = vector.broadcast %cst : f32 to vector<11x16xf32>
    %c0 = arith.constant 0 : index
    %c0_0 = arith.constant 0 : index
    %5 = vector.load %arg4[%c0, %c0_0] : memref<11x16xf32, #tpu.memory_space<vmem>>, vector<11x16xf32>
    tpu.vector_store %arg4[%c0, %c0_0], %4 {strides = array<i32>} : memref<11x16xf32, #tpu.memory_space<vmem>>, vector<11x16xf32>,
    %c0_1 = arith.constant 0 : index
    %c0_2 = arith.constant 0 : index
    %c0_3 = arith.constant 0 : index
    %6 = vector.load %arg1[%c0_1, %c0_2, %c0_3] : memref<1x6x16xf32, #tpu.memory_space<vmem>>, vector<1x6x16xf32>
    %7 = vector.shape_cast %6 : vector<1x6x16xf32> to vector<6x16xf32>
    %c0_4 = arith.constant 0 : index
    %c0_5 = arith.constant 0 : index
    %8 = vector.load %arg4[%c0_4, %c0_5] : memref<11x16xf32, #tpu.memory_space<vmem>>, vector<6x16xf32>
    tpu.vector_store %arg4[%c0_4, %c0_5], %7 {strides = array<i32>} : memref<11x16xf32, #tpu.memory_space<vmem>>, vector<6x16xf32>,
    %c6_i32 = arith.constant 6 : i32
    %9 = vector.broadcast %c6_i32 : i32 to vector<11x1xi32>
    %10 = arith.cmpi slt, %0, %9 : vector<11x1xi32>
    %cst_6 = arith.constant 0.000000e+00 : f32
    %cst_7 = arith.constant 0x7F800000 : f32
    %11 = vector.broadcast %cst_6 : f32 to vector<11x1xf32>
    %12 = vector.broadcast %cst_7 : f32 to vector<11x1xf32>
    %13 = arith.select %10, %11, %12 : vector<11x1xi1>, vector<11x1xf32>
    %c0_8 = arith.constant 0 : index
    %c0_9 = arith.constant 0 : index
    %14 = vector.load %arg5[%c0_8, %c0_9] : memref<11x1xf32, #tpu.memory_space<vmem>>, vector<11x1xf32>
    tpu.vector_store %arg5[%c0_8, %c0_9], %13 {strides = array<i32>} : memref<11x1xf32, #tpu.memory_space<vmem>>, vector<11x1xf32>,
    %c6_i32_10 = arith.constant 6 : i32
    %15 = vector.broadcast %c6_i32_10 : i32 to vector<1x11xi32>
    %16 = arith.cmpi slt, %1, %15 : vector<1x11xi32>
    %cst_11 = arith.constant 0.000000e+00 : f32
    %cst_12 = arith.constant 0x7F800000 : f32
    %17 = vector.broadcast %cst_11 : f32 to vector<1x11xf32>
    %18 = vector.broadcast %cst_12 : f32 to vector<1x11xf32>
    %19 = arith.select %16, %17, %18 : vector<1x11xi1>, vector<1x11xf32>
    %c0_13 = arith.constant 0 : index
    %c0_14 = arith.constant 0 : index
    %20 = vector.load %arg6[%c0_13, %c0_14] : memref<1x11xf32, #tpu.memory_space<vmem>>, vector<1x11xf32>
    tpu.vector_store %arg6[%c0_13, %c0_14], %19 {strides = array<i32>} : memref<1x11xf32, #tpu.memory_space<vmem>>, vector<1x11xf32>,
    %c0_15 = arith.constant 0 : index
    %c0_16 = arith.constant 0 : index
    %21 = vector.load %arg2[%c0_15, %c0_16] : memref<3x16xf32, #tpu.memory_space<vmem>>, vector<3x16xf32>
    %22 = vector.extract_strided_slice %21 {offsets = [0, 0], sizes = [1, 16], strides = [1, 1]} : vector<3x16xf32> to vector<1x16xf32>
    %23 = vector.extract_strided_slice %21 {offsets = [1, 0], sizes = [1, 16], strides = [1, 1]} : vector<3x16xf32> to vector<1x16xf32>
    %24 = vector.extract_strided_slice %21 {offsets = [2, 0], sizes = [1, 16], strides = [1, 1]} : vector<3x16xf32> to vector<1x16xf32>
    %cst_17 = arith.constant 0x7F800000 : f32
    %c0_i32 = arith.constant 0 : i32
    %c0_18 = arith.constant 0 : index
    %c0_19 = arith.constant 0 : index
    %25 = vector.load %arg4[%c0_18, %c0_19] : memref<11x16xf32, #tpu.memory_space<vmem>>, vector<11x16xf32>
    %cst_20 = arith.constant dense<0.000000e+00> : vector<11x11xf32>
    %26 = tpu.matmul %25, %25, %cst_20 {dimension_numbers = #tpu.dot_dimension_numbers<[1], [1], [0], [0], [0, 0, 1, 0], [], []>} : vector<11x16xf32>, vector<11x16xf32>, vector<11x11xf32> -> vector<11x11xf32>
    %27 = arith.cmpi eq, %2, %3 : vector<11x11xi32>
    %cst_21 = arith.constant 0.000000e+00 : f32
    %28 = vector.broadcast %cst_21 : f32 to vector<11x11xf32>
    %29 = arith.select %27, %26, %28 : vector<11x11xi1>, vector<11x11xf32>
    %cst_22 = arith.constant dense<0.000000e+00> : vector<11xf32>
    %30 = vector.multi_reduction <add>, %29, %cst_22 [1] : vector<11x11xf32> to vector<11xf32>
    %31 = vector.shape_cast %30 : vector<11xf32> to vector<11x1xf32>
    %cst_23 = arith.constant dense<0.000000e+00> : vector<11xf32>
    %32 = vector.multi_reduction <add>, %29, %cst_23 [0] : vector<11x11xf32> to vector<11xf32>
    %33 = vector.shape_cast %32 : vector<11xf32> to vector<1x11xf32>
    %34 = vector.broadcast %31 : vector<11x1xf32> to vector<11x11xf32>
    %35 = vector.broadcast %33 : vector<1x11xf32> to vector<11x11xf32>
    %36 = arith.addf %34, %35 : vector<11x11xf32>
    %cst_24 = arith.constant 2.000000e+00 : f32
    %37 = vector.broadcast %cst_24 : f32 to vector<11x11xf32>
    %38 = arith.mulf %37, %26 : vector<11x11xf32>
    %39 = arith.subf %36, %38 : vector<11x11xf32>
    %40 = arith.cmpi eq, %2, %3 : vector<11x11xi32>
    %41 = vector.broadcast %cst_17 : f32 to vector<11x11xf32>
    %42 = arith.select %40, %41, %39 : vector<11x11xi1>, vector<11x11xf32>
    %c0_25 = arith.constant 0 : index
    %c0_26 = arith.constant 0 : index
    %43 = vector.load %arg5[%c0_25, %c0_26] : memref<11x1xf32, #tpu.memory_space<vmem>>, vector<11x1xf32>
    %44 = vector.broadcast %43 : vector<11x1xf32> to vector<11x11xf32>
    %45 = arith.addf %42, %44 : vector<11x11xf32>
    %c0_27 = arith.constant 0 : index
    %c0_28 = arith.constant 0 : index
    %46 = vector.load %arg6[%c0_27, %c0_28] : memref<1x11xf32, #tpu.memory_space<vmem>>, vector<1x11xf32>
    %47 = vector.broadcast %46 : vector<1x11xf32> to vector<11x11xf32>
    %48 = arith.addf %45, %47 : vector<11x11xf32>
    %cst_29 = arith.constant dense<0x7F800000> : vector<11xf32>
    %49 = vector.multi_reduction <minimumf>, %48, %cst_29 [1] : vector<11x11xf32> to vector<11xf32>
    %50 = vector.shape_cast %49 : vector<11xf32> to vector<11x1xf32>
    %cst_30 = arith.constant dense<0x7F800000> : vector<1xf32>
    %51 = vector.multi_reduction <minimumf>, %50, %cst_30 [0] : vector<11x1xf32> to vector<1xf32>
    %52 = vector.shape_cast %51 : vector<1xf32> to vector<1x1xf32>
    %c11_i32 = arith.constant 11 : i32
    %53 = vector.broadcast %c11_i32 : i32 to vector<11x11xi32>
    %54 = arith.muli %2, %53 : vector<11x11xi32>
    %55 = arith.addi %54, %3 : vector<11x11xi32>
    %56 = vector.broadcast %52 : vector<1x1xf32> to vector<11x11xf32>
    %57 = arith.cmpf oeq, %48, %56 : vector<11x11xf32>
    %c121_i32 = arith.constant 121 : i32
    %58 = vector.broadcast %c121_i32 : i32 to vector<11x11xi32>
    %59 = arith.select %57, %55, %58 : vector<11x11xi1>, vector<11x11xi32>
    %cst_31 = arith.constant dense<2147483647> : vector<11xi32>
    %60 = vector.multi_reduction <minsi>, %59, %cst_31 [1] : vector<11x11xi32> to vector<11xi32>
    %61 = vector.shape_cast %60 : vector<11xi32> to vector<11x1xi32>
    %cst_32 = arith.constant dense<2147483647> : vector<1xi32>
    %62 = vector.multi_reduction <minsi>, %61, %cst_32 [0] : vector<11x1xi32> to vector<1xi32>
    %63 = vector.shape_cast %62 : vector<1xi32> to vector<1x1xi32>
    %64 = vector.broadcast %63 : vector<1x1xi32> to vector<11x11xi32>
    %65 = arith.cmpi eq, %59, %64 : vector<11x11xi32>
    %c11_i32_33 = arith.constant 11 : i32
    %66 = vector.broadcast %c11_i32_33 : i32 to vector<11x11xi32>
    %67 = arith.select %65, %2, %66 : vector<11x11xi1>, vector<11x11xi32>
    %cst_34 = arith.constant dense<2147483647> : vector<11xi32>
    %68 = vector.multi_reduction <minsi>, %67, %cst_34 [1] : vector<11x11xi32> to vector<11xi32>
    %69 = vector.shape_cast %68 : vector<11xi32> to vector<11x1xi32>
    %cst_35 = arith.constant dense<2147483647> : vector<1xi32>
    %70 = vector.multi_reduction <minsi>, %69, %cst_35 [0] : vector<11x1xi32> to vector<1xi32>
    %71 = vector.shape_cast %70 : vector<1xi32> to vector<1x1xi32>
    %c11_i32_36 = arith.constant 11 : i32
    %72 = vector.broadcast %c11_i32_36 : i32 to vector<11x11xi32>
    %73 = arith.select %65, %3, %72 : vector<11x11xi1>, vector<11x11xi32>
    %cst_37 = arith.constant dense<2147483647> : vector<11xi32>
    %74 = vector.multi_reduction <minsi>, %73, %cst_37 [1] : vector<11x11xi32> to vector<11xi32>
    %75 = vector.shape_cast %74 : vector<11xi32> to vector<11x1xi32>
    %cst_38 = arith.constant dense<2147483647> : vector<1xi32>
    %76 = vector.multi_reduction <minsi>, %75, %cst_38 [0] : vector<11x1xi32> to vector<1xi32>
    %77 = vector.shape_cast %76 : vector<1xi32> to vector<1x1xi32>
    %78 = vector.broadcast %71 : vector<1x1xi32> to vector<11x1xi32>
    %79 = arith.cmpi eq, %0, %78 : vector<11x1xi32>
    %80 = vector.broadcast %77 : vector<1x1xi32> to vector<11x1xi32>
    %81 = arith.cmpi eq, %0, %80 : vector<11x1xi32>
    %cst_39 = arith.constant 0.000000e+00 : f32
    %82 = vector.shape_cast %79 : vector<11x1xi1> to vector<11x1xi1>
    %83 = vector.broadcast %82 : vector<11x1xi1> to vector<11x16xi1>
    %84 = vector.broadcast %cst_39 : f32 to vector<11x16xf32>
    %85 = arith.select %83, %25, %84 : vector<11x16xi1>, vector<11x16xf32>
    %cst_40 = arith.constant dense<0.000000e+00> : vector<16xf32>
    %86 = vector.multi_reduction <add>, %85, %cst_40 [0] : vector<11x16xf32> to vector<16xf32>
    %87 = vector.shape_cast %86 : vector<16xf32> to vector<1x16xf32>
    %cst_41 = arith.constant 0.000000e+00 : f32
    %88 = vector.shape_cast %81 : vector<11x1xi1> to vector<11x1xi1>
    %89 = vector.broadcast %88 : vector<11x1xi1> to vector<11x16xi1>
    %90 = vector.broadcast %cst_41 : f32 to vector<11x16xf32>
    %91 = arith.select %89, %25, %90 : vector<11x16xi1>, vector<11x16xf32>
    %cst_42 = arith.constant dense<0.000000e+00> : vector<16xf32>
    %92 = vector.multi_reduction <add>, %91, %cst_42 [0] : vector<11x16xf32> to vector<16xf32>
    %93 = vector.shape_cast %92 : vector<16xf32> to vector<1x16xf32>
    %94 = arith.mulf %87, %22 : vector<1x16xf32>
    %95 = arith.mulf %93, %23 : vector<1x16xf32>
    %96 = arith.addf %94, %95 : vector<1x16xf32>
    %97 = arith.addf %96, %24 : vector<1x16xf32>
    %c6_i32_43 = arith.constant 6 : i32
    %98 = arith.addi %c6_i32_43, %c0_i32 : i32
    %99 = vector.broadcast %98 : i32 to vector<11x1xi32>
    %100 = arith.cmpi eq, %0, %99 : vector<11x1xi32>
    %101 = vector.shape_cast %100 : vector<11x1xi1> to vector<11x1xi1>
    %102 = vector.broadcast %101 : vector<11x1xi1> to vector<11x16xi1>
    %103 = vector.shape_cast %97 : vector<1x16xf32> to vector<1x16xf32>
    %104 = vector.broadcast %103 : vector<1x16xf32> to vector<11x16xf32>
    %105 = arith.select %102, %104, %25 : vector<11x16xi1>, vector<11x16xf32>
    %c0_44 = arith.constant 0 : index
    %c0_45 = arith.constant 0 : index
    %106 = vector.load %arg4[%c0_44, %c0_45] : memref<11x16xf32, #tpu.memory_space<vmem>>, vector<11x16xf32>
    tpu.vector_store %arg4[%c0_44, %c0_45], %105 {strides = array<i32>} : memref<11x16xf32, #tpu.memory_space<vmem>>, vector<11x16xf32>,
    %107 = arith.ori %79, %81 : vector<11x1xi1>
    %108 = vector.broadcast %98 : i32 to vector<11x1xi32>
    %109 = arith.cmpi eq, %0, %108 : vector<11x1xi32>
    %c0_46 = arith.constant 0 : index
    %c0_47 = arith.constant 0 : index
    %110 = vector.load %arg5[%c0_46, %c0_47] : memref<11x1xf32, #tpu.memory_space<vmem>>, vector<11x1xf32>
    %cst_48 = arith.constant 0.000000e+00 : f32
    %111 = vector.broadcast %cst_48 : f32 to vector<11x1xf32>
    %112 = arith.select %109, %111, %110 : vector<11x1xi1>, vector<11x1xf32>
    %113 = vector.broadcast %cst_17 : f32 to vector<11x1xf32>
    %114 = arith.select %107, %113, %112 : vector<11x1xi1>, vector<11x1xf32>
    %c0_49 = arith.constant 0 : index
    %c0_50 = arith.constant 0 : index
    %115 = vector.load %arg5[%c0_49, %c0_50] : memref<11x1xf32, #tpu.memory_space<vmem>>, vector<11x1xf32>
    tpu.vector_store %arg5[%c0_49, %c0_50], %114 {strides = array<i32>} : memref<11x1xf32, #tpu.memory_space<vmem>>, vector<11x1xf32>,
    %116 = vector.broadcast %71 : vector<1x1xi32> to vector<1x11xi32>
    %117 = arith.cmpi eq, %1, %116 : vector<1x11xi32>
    %118 = vector.broadcast %77 : vector<1x1xi32> to vector<1x11xi32>
    %119 = arith.cmpi eq, %1, %118 : vector<1x11xi32>
    %120 = arith.ori %117, %119 : vector<1x11xi1>
    %121 = vector.broadcast %98 : i32 to vector<1x11xi32>
    %122 = arith.cmpi eq, %1, %121 : vector<1x11xi32>
    %c0_51 = arith.constant 0 : index
    %c0_52 = arith.constant 0 : index
    %123 = vector.load %arg6[%c0_51, %c0_52] : memref<1x11xf32, #tpu.memory_space<vmem>>, vector<1x11xf32>
    %cst_53 = arith.constant 0.000000e+00 : f32
    %124 = vector.broadcast %cst_53 : f32 to vector<1x11xf32>
    %125 = arith.select %122, %124, %123 : vector<1x11xi1>, vector<1x11xf32>
    %126 = vector.broadcast %cst_17 : f32 to vector<1x11xf32>
    %127 = arith.select %120, %126, %125 : vector<1x11xi1>, vector<1x11xf32>
    %c0_54 = arith.constant 0 : index
    %c0_55 = arith.constant 0 : index
    %128 = vector.load %arg6[%c0_54, %c0_55] : memref<1x11xf32, #tpu.memory_space<vmem>>, vector<1x11xf32>
    tpu.vector_store %arg6[%c0_54, %c0_55], %127 {strides = array<i32>} : memref<1x11xf32, #tpu.memory_space<vmem>>, vector<1x11xf32>,
    %c1_i32 = arith.constant 1 : i32
    %c0_56 = arith.constant 0 : index
    %c0_57 = arith.constant 0 : index
    %129 = vector.load %arg4[%c0_56, %c0_57] : memref<11x16xf32, #tpu.memory_space<vmem>>, vector<11x16xf32>
    %cst_58 = arith.constant dense<0.000000e+00> : vector<11x11xf32>
    %130 = tpu.matmul %129, %129, %cst_58 {dimension_numbers = #tpu.dot_dimension_numbers<[1], [1], [0], [0], [0, 0, 1, 0], [], []>} : vector<11x16xf32>, vector<11x16xf32>, vector<11x11xf32> -> vector<11x11xf32>
    %131 = arith.cmpi eq, %2, %3 : vector<11x11xi32>
    %cst_59 = arith.constant 0.000000e+00 : f32
    %132 = vector.broadcast %cst_59 : f32 to vector<11x11xf32>
    %133 = arith.select %131, %130, %132 : vector<11x11xi1>, vector<11x11xf32>
    %cst_60 = arith.constant dense<0.000000e+00> : vector<11xf32>
    %134 = vector.multi_reduction <add>, %133, %cst_60 [1] : vector<11x11xf32> to vector<11xf32>
    %135 = vector.shape_cast %134 : vector<11xf32> to vector<11x1xf32>
    %cst_61 = arith.constant dense<0.000000e+00> : vector<11xf32>
    %136 = vector.multi_reduction <add>, %133, %cst_61 [0] : vector<11x11xf32> to vector<11xf32>
    %137 = vector.shape_cast %136 : vector<11xf32> to vector<1x11xf32>
    %138 = vector.broadcast %135 : vector<11x1xf32> to vector<11x11xf32>
    %139 = vector.broadcast %137 : vector<1x11xf32> to vector<11x11xf32>
    %140 = arith.addf %138, %139 : vector<11x11xf32>
    %cst_62 = arith.constant 2.000000e+00 : f32
    %141 = vector.broadcast %cst_62 : f32 to vector<11x11xf32>
    %142 = arith.mulf %141, %130 : vector<11x11xf32>
    %143 = arith.subf %140, %142 : vector<11x11xf32>
    %144 = arith.cmpi eq, %2, %3 : vector<11x11xi32>
    %145 = vector.broadcast %cst_17 : f32 to vector<11x11xf32>
    %146 = arith.select %144, %145, %143 : vector<11x11xi1>, vector<11x11xf32>
    %c0_63 = arith.constant 0 : index
    %c0_64 = arith.constant 0 : index
    %147 = vector.load %arg5[%c0_63, %c0_64] : memref<11x1xf32, #tpu.memory_space<vmem>>, vector<11x1xf32>
    %148 = vector.broadcast %147 : vector<11x1xf32> to vector<11x11xf32>
    %149 = arith.addf %146, %148 : vector<11x11xf32>
    %c0_65 = arith.constant 0 : index
    %c0_66 = arith.constant 0 : index
    %150 = vector.load %arg6[%c0_65, %c0_66] : memref<1x11xf32, #tpu.memory_space<vmem>>, vector<1x11xf32>
    %151 = vector.broadcast %150 : vector<1x11xf32> to vector<11x11xf32>
    %152 = arith.addf %149, %151 : vector<11x11xf32>
    %cst_67 = arith.constant dense<0x7F800000> : vector<11xf32>
    %153 = vector.multi_reduction <minimumf>, %152, %cst_67 [1] : vector<11x11xf32> to vector<11xf32>
    %154 = vector.shape_cast %153 : vector<11xf32> to vector<11x1xf32>
    %cst_68 = arith.constant dense<0x7F800000> : vector<1xf32>
    %155 = vector.multi_reduction <minimumf>, %154, %cst_68 [0] : vector<11x1xf32> to vector<1xf32>
    %156 = vector.shape_cast %155 : vector<1xf32> to vector<1x1xf32>
    %c11_i32_69 = arith.constant 11 : i32
    %157 = vector.broadcast %c11_i32_69 : i32 to vector<11x11xi32>
    %158 = arith.muli %2, %157 : vector<11x11xi32>
    %159 = arith.addi %158, %3 : vector<11x11xi32>
    %160 = vector.broadcast %156 : vector<1x1xf32> to vector<11x11xf32>
    %161 = arith.cmpf oeq, %152, %160 : vector<11x11xf32>
    %c121_i32_70 = arith.constant 121 : i32
    %162 = vector.broadcast %c121_i32_70 : i32 to vector<11x11xi32>
    %163 = arith.select %161, %159, %162 : vector<11x11xi1>, vector<11x11xi32>
    %cst_71 = arith.constant dense<2147483647> : vector<11xi32>
    %164 = vector.multi_reduction <minsi>, %163, %cst_71 [1] : vector<11x11xi32> to vector<11xi32>
    %165 = vector.shape_cast %164 : vector<11xi32> to vector<11x1xi32>
    %cst_72 = arith.constant dense<2147483647> : vector<1xi32>
    %166 = vector.multi_reduction <minsi>, %165, %cst_72 [0] : vector<11x1xi32> to vector<1xi32>
    %167 = vector.shape_cast %166 : vector<1xi32> to vector<1x1xi32>
    %168 = vector.broadcast %167 : vector<1x1xi32> to vector<11x11xi32>
    %169 = arith.cmpi eq, %163, %168 : vector<11x11xi32>
    %c11_i32_73 = arith.constant 11 : i32
    %170 = vector.broadcast %c11_i32_73 : i32 to vector<11x11xi32>
    %171 = arith.select %169, %2, %170 : vector<11x11xi1>, vector<11x11xi32>
    %cst_74 = arith.constant dense<2147483647> : vector<11xi32>
    %172 = vector.multi_reduction <minsi>, %171, %cst_74 [1] : vector<11x11xi32> to vector<11xi32>
    %173 = vector.shape_cast %172 : vector<11xi32> to vector<11x1xi32>
    %cst_75 = arith.constant dense<2147483647> : vector<1xi32>
    %174 = vector.multi_reduction <minsi>, %173, %cst_75 [0] : vector<11x1xi32> to vector<1xi32>
    %175 = vector.shape_cast %174 : vector<1xi32> to vector<1x1xi32>
    %c11_i32_76 = arith.constant 11 : i32
    %176 = vector.broadcast %c11_i32_76 : i32 to vector<11x11xi32>
    %177 = arith.select %169, %3, %176 : vector<11x11xi1>, vector<11x11xi32>
    %cst_77 = arith.constant dense<2147483647> : vector<11xi32>
    %178 = vector.multi_reduction <minsi>, %177, %cst_77 [1] : vector<11x11xi32> to vector<11xi32>
    %179 = vector.shape_cast %178 : vector<11xi32> to vector<11x1xi32>
    %cst_78 = arith.constant dense<2147483647> : vector<1xi32>
    %180 = vector.multi_reduction <minsi>, %179, %cst_78 [0] : vector<11x1xi32> to vector<1xi32>
    %181 = vector.shape_cast %180 : vector<1xi32> to vector<1x1xi32>
    %182 = vector.broadcast %175 : vector<1x1xi32> to vector<11x1xi32>
    %183 = arith.cmpi eq, %0, %182 : vector<11x1xi32>
    %184 = vector.broadcast %181 : vector<1x1xi32> to vector<11x1xi32>
    %185 = arith.cmpi eq, %0, %184 : vector<11x1xi32>
    %cst_79 = arith.constant 0.000000e+00 : f32
    %186 = vector.shape_cast %183 : vector<11x1xi1> to vector<11x1xi1>
    %187 = vector.broadcast %186 : vector<11x1xi1> to vector<11x16xi1>
    %188 = vector.broadcast %cst_79 : f32 to vector<11x16xf32>
    %189 = arith.select %187, %129, %188 : vector<11x16xi1>, vector<11x16xf32>
    %cst_80 = arith.constant dense<0.000000e+00> : vector<16xf32>
    %190 = vector.multi_reduction <add>, %189, %cst_80 [0] : vector<11x16xf32> to vector<16xf32>
    %191 = vector.shape_cast %190 : vector<16xf32> to vector<1x16xf32>
    %cst_81 = arith.constant 0.000000e+00 : f32
    %192 = vector.shape_cast %185 : vector<11x1xi1> to vector<11x1xi1>
    %193 = vector.broadcast %192 : vector<11x1xi1> to vector<11x16xi1>
    %194 = vector.broadcast %cst_81 : f32 to vector<11x16xf32>
    %195 = arith.select %193, %129, %194 : vector<11x16xi1>, vector<11x16xf32>
    %cst_82 = arith.constant dense<0.000000e+00> : vector<16xf32>
    %196 = vector.multi_reduction <add>, %195, %cst_82 [0] : vector<11x16xf32> to vector<16xf32>
    %197 = vector.shape_cast %196 : vector<16xf32> to vector<1x16xf32>
    %198 = arith.mulf %191, %22 : vector<1x16xf32>
    %199 = arith.mulf %197, %23 : vector<1x16xf32>
    %200 = arith.addf %198, %199 : vector<1x16xf32>
    %201 = arith.addf %200, %24 : vector<1x16xf32>
    %c6_i32_83 = arith.constant 6 : i32
    %202 = arith.addi %c6_i32_83, %c1_i32 : i32
    %203 = vector.broadcast %202 : i32 to vector<11x1xi32>
    %204 = arith.cmpi eq, %0, %203 : vector<11x1xi32>
    %205 = vector.shape_cast %204 : vector<11x1xi1> to vector<11x1xi1>
    %206 = vector.broadcast %205 : vector<11x1xi1> to vector<11x16xi1>
    %207 = vector.shape_cast %201 : vector<1x16xf32> to vector<1x16xf32>
    %208 = vector.broadcast %207 : vector<1x16xf32> to vector<11x16xf32>
    %209 = arith.select %206, %208, %129 : vector<11x16xi1>, vector<11x16xf32>
    %c0_84 = arith.constant 0 : index
    %c0_85 = arith.constant 0 : index
    %210 = vector.load %arg4[%c0_84, %c0_85] : memref<11x16xf32, #tpu.memory_space<vmem>>, vector<11x16xf32>
    tpu.vector_store %arg4[%c0_84, %c0_85], %209 {strides = array<i32>} : memref<11x16xf32, #tpu.memory_space<vmem>>, vector<11x16xf32>,
    %211 = arith.ori %183, %185 : vector<11x1xi1>
    %212 = vector.broadcast %202 : i32 to vector<11x1xi32>
    %213 = arith.cmpi eq, %0, %212 : vector<11x1xi32>
    %c0_86 = arith.constant 0 : index
    %c0_87 = arith.constant 0 : index
    %214 = vector.load %arg5[%c0_86, %c0_87] : memref<11x1xf32, #tpu.memory_space<vmem>>, vector<11x1xf32>
    %cst_88 = arith.constant 0.000000e+00 : f32
    %215 = vector.broadcast %cst_88 : f32 to vector<11x1xf32>
    %216 = arith.select %213, %215, %214 : vector<11x1xi1>, vector<11x1xf32>
    %217 = vector.broadcast %cst_17 : f32 to vector<11x1xf32>
    %218 = arith.select %211, %217, %216 : vector<11x1xi1>, vector<11x1xf32>
    %c0_89 = arith.constant 0 : index
    %c0_90 = arith.constant 0 : index
    %219 = vector.load %arg5[%c0_89, %c0_90] : memref<11x1xf32, #tpu.memory_space<vmem>>, vector<11x1xf32>
    tpu.vector_store %arg5[%c0_89, %c0_90], %218 {strides = array<i32>} : memref<11x1xf32, #tpu.memory_space<vmem>>, vector<11x1xf32>,
    %220 = vector.broadcast %175 : vector<1x1xi32> to vector<1x11xi32>
    %221 = arith.cmpi eq, %1, %220 : vector<1x11xi32>
    %222 = vector.broadcast %181 : vector<1x1xi32> to vector<1x11xi32>
    %223 = arith.cmpi eq, %1, %222 : vector<1x11xi32>
    %224 = arith.ori %221, %223 : vector<1x11xi1>
    %225 = vector.broadcast %202 : i32 to vector<1x11xi32>
    %226 = arith.cmpi eq, %1, %225 : vector<1x11xi32>
    %c0_91 = arith.constant 0 : index
    %c0_92 = arith.constant 0 : index
    %227 = vector.load %arg6[%c0_91, %c0_92] : memref<1x11xf32, #tpu.memory_space<vmem>>, vector<1x11xf32>
    %cst_93 = arith.constant 0.000000e+00 : f32
    %228 = vector.broadcast %cst_93 : f32 to vector<1x11xf32>
    %229 = arith.select %226, %228, %227 : vector<1x11xi1>, vector<1x11xf32>
    %230 = vector.broadcast %cst_17 : f32 to vector<1x11xf32>
    %231 = arith.select %224, %230, %229 : vector<1x11xi1>, vector<1x11xf32>
    %c0_94 = arith.constant 0 : index
    %c0_95 = arith.constant 0 : index
    %232 = vector.load %arg6[%c0_94, %c0_95] : memref<1x11xf32, #tpu.memory_space<vmem>>, vector<1x11xf32>
    tpu.vector_store %arg6[%c0_94, %c0_95], %231 {strides = array<i32>} : memref<1x11xf32, #tpu.memory_space<vmem>>, vector<1x11xf32>,
    %c2_i32 = arith.constant 2 : i32
    %c0_96 = arith.constant 0 : index
    %c0_97 = arith.constant 0 : index
    %233 = vector.load %arg4[%c0_96, %c0_97] : memref<11x16xf32, #tpu.memory_space<vmem>>, vector<11x16xf32>
    %cst_98 = arith.constant dense<0.000000e+00> : vector<11x11xf32>
    %234 = tpu.matmul %233, %233, %cst_98 {dimension_numbers = #tpu.dot_dimension_numbers<[1], [1], [0], [0], [0, 0, 1, 0], [], []>} : vector<11x16xf32>, vector<11x16xf32>, vector<11x11xf32> -> vector<11x11xf32>
    %235 = arith.cmpi eq, %2, %3 : vector<11x11xi32>
    %cst_99 = arith.constant 0.000000e+00 : f32
    %236 = vector.broadcast %cst_99 : f32 to vector<11x11xf32>
    %237 = arith.select %235, %234, %236 : vector<11x11xi1>, vector<11x11xf32>
    %cst_100 = arith.constant dense<0.000000e+00> : vector<11xf32>
    %238 = vector.multi_reduction <add>, %237, %cst_100 [1] : vector<11x11xf32> to vector<11xf32>
    %239 = vector.shape_cast %238 : vector<11xf32> to vector<11x1xf32>
    %cst_101 = arith.constant dense<0.000000e+00> : vector<11xf32>
    %240 = vector.multi_reduction <add>, %237, %cst_101 [0] : vector<11x11xf32> to vector<11xf32>
    %241 = vector.shape_cast %240 : vector<11xf32> to vector<1x11xf32>
    %242 = vector.broadcast %239 : vector<11x1xf32> to vector<11x11xf32>
    %243 = vector.broadcast %241 : vector<1x11xf32> to vector<11x11xf32>
    %244 = arith.addf %242, %243 : vector<11x11xf32>
    %cst_102 = arith.constant 2.000000e+00 : f32
    %245 = vector.broadcast %cst_102 : f32 to vector<11x11xf32>
    %246 = arith.mulf %245, %234 : vector<11x11xf32>
    %247 = arith.subf %244, %246 : vector<11x11xf32>
    %248 = arith.cmpi eq, %2, %3 : vector<11x11xi32>
    %249 = vector.broadcast %cst_17 : f32 to vector<11x11xf32>
    %250 = arith.select %248, %249, %247 : vector<11x11xi1>, vector<11x11xf32>
    %c0_103 = arith.constant 0 : index
    %c0_104 = arith.constant 0 : index
    %251 = vector.load %arg5[%c0_103, %c0_104] : memref<11x1xf32, #tpu.memory_space<vmem>>, vector<11x1xf32>
    %252 = vector.broadcast %251 : vector<11x1xf32> to vector<11x11xf32>
    %253 = arith.addf %250, %252 : vector<11x11xf32>
    %c0_105 = arith.constant 0 : index
    %c0_106 = arith.constant 0 : index
    %254 = vector.load %arg6[%c0_105, %c0_106] : memref<1x11xf32, #tpu.memory_space<vmem>>, vector<1x11xf32>
    %255 = vector.broadcast %254 : vector<1x11xf32> to vector<11x11xf32>
    %256 = arith.addf %253, %255 : vector<11x11xf32>
    %cst_107 = arith.constant dense<0x7F800000> : vector<11xf32>
    %257 = vector.multi_reduction <minimumf>, %256, %cst_107 [1] : vector<11x11xf32> to vector<11xf32>
    %258 = vector.shape_cast %257 : vector<11xf32> to vector<11x1xf32>
    %cst_108 = arith.constant dense<0x7F800000> : vector<1xf32>
    %259 = vector.multi_reduction <minimumf>, %258, %cst_108 [0] : vector<11x1xf32> to vector<1xf32>
    %260 = vector.shape_cast %259 : vector<1xf32> to vector<1x1xf32>
    %c11_i32_109 = arith.constant 11 : i32
    %261 = vector.broadcast %c11_i32_109 : i32 to vector<11x11xi32>
    %262 = arith.muli %2, %261 : vector<11x11xi32>
    %263 = arith.addi %262, %3 : vector<11x11xi32>
    %264 = vector.broadcast %260 : vector<1x1xf32> to vector<11x11xf32>
    %265 = arith.cmpf oeq, %256, %264 : vector<11x11xf32>
    %c121_i32_110 = arith.constant 121 : i32
    %266 = vector.broadcast %c121_i32_110 : i32 to vector<11x11xi32>
    %267 = arith.select %265, %263, %266 : vector<11x11xi1>, vector<11x11xi32>
    %cst_111 = arith.constant dense<2147483647> : vector<11xi32>
    %268 = vector.multi_reduction <minsi>, %267, %cst_111 [1] : vector<11x11xi32> to vector<11xi32>
    %269 = vector.shape_cast %268 : vector<11xi32> to vector<11x1xi32>
    %cst_112 = arith.constant dense<2147483647> : vector<1xi32>
    %270 = vector.multi_reduction <minsi>, %269, %cst_112 [0] : vector<11x1xi32> to vector<1xi32>
    %271 = vector.shape_cast %270 : vector<1xi32> to vector<1x1xi32>
    %272 = vector.broadcast %271 : vector<1x1xi32> to vector<11x11xi32>
    %273 = arith.cmpi eq, %267, %272 : vector<11x11xi32>
    %c11_i32_113 = arith.constant 11 : i32
    %274 = vector.broadcast %c11_i32_113 : i32 to vector<11x11xi32>
    %275 = arith.select %273, %2, %274 : vector<11x11xi1>, vector<11x11xi32>
    %cst_114 = arith.constant dense<2147483647> : vector<11xi32>
    %276 = vector.multi_reduction <minsi>, %275, %cst_114 [1] : vector<11x11xi32> to vector<11xi32>
    %277 = vector.shape_cast %276 : vector<11xi32> to vector<11x1xi32>
    %cst_115 = arith.constant dense<2147483647> : vector<1xi32>
    %278 = vector.multi_reduction <minsi>, %277, %cst_115 [0] : vector<11x1xi32> to vector<1xi32>
    %279 = vector.shape_cast %278 : vector<1xi32> to vector<1x1xi32>
    %c11_i32_116 = arith.constant 11 : i32
    %280 = vector.broadcast %c11_i32_116 : i32 to vector<11x11xi32>
    %281 = arith.select %273, %3, %280 : vector<11x11xi1>, vector<11x11xi32>
    %cst_117 = arith.constant dense<2147483647> : vector<11xi32>
    %282 = vector.multi_reduction <minsi>, %281, %cst_117 [1] : vector<11x11xi32> to vector<11xi32>
    %283 = vector.shape_cast %282 : vector<11xi32> to vector<11x1xi32>
    %cst_118 = arith.constant dense<2147483647> : vector<1xi32>
    %284 = vector.multi_reduction <minsi>, %283, %cst_118 [0] : vector<11x1xi32> to vector<1xi32>
    %285 = vector.shape_cast %284 : vector<1xi32> to vector<1x1xi32>
    %286 = vector.broadcast %279 : vector<1x1xi32> to vector<11x1xi32>
    %287 = arith.cmpi eq, %0, %286 : vector<11x1xi32>
    %288 = vector.broadcast %285 : vector<1x1xi32> to vector<11x1xi32>
    %289 = arith.cmpi eq, %0, %288 : vector<11x1xi32>
    %cst_119 = arith.constant 0.000000e+00 : f32
    %290 = vector.shape_cast %287 : vector<11x1xi1> to vector<11x1xi1>
    %291 = vector.broadcast %290 : vector<11x1xi1> to vector<11x16xi1>
    %292 = vector.broadcast %cst_119 : f32 to vector<11x16xf32>
    %293 = arith.select %291, %233, %292 : vector<11x16xi1>, vector<11x16xf32>
    %cst_120 = arith.constant dense<0.000000e+00> : vector<16xf32>
    %294 = vector.multi_reduction <add>, %293, %cst_120 [0] : vector<11x16xf32> to vector<16xf32>
    %295 = vector.shape_cast %294 : vector<16xf32> to vector<1x16xf32>
    %cst_121 = arith.constant 0.000000e+00 : f32
    %296 = vector.shape_cast %289 : vector<11x1xi1> to vector<11x1xi1>
    %297 = vector.broadcast %296 : vector<11x1xi1> to vector<11x16xi1>
    %298 = vector.broadcast %cst_121 : f32 to vector<11x16xf32>
    %299 = arith.select %297, %233, %298 : vector<11x16xi1>, vector<11x16xf32>
    %cst_122 = arith.constant dense<0.000000e+00> : vector<16xf32>
    %300 = vector.multi_reduction <add>, %299, %cst_122 [0] : vector<11x16xf32> to vector<16xf32>
    %301 = vector.shape_cast %300 : vector<16xf32> to vector<1x16xf32>
    %302 = arith.mulf %295, %22 : vector<1x16xf32>
    %303 = arith.mulf %301, %23 : vector<1x16xf32>
    %304 = arith.addf %302, %303 : vector<1x16xf32>
    %305 = arith.addf %304, %24 : vector<1x16xf32>
    %c6_i32_123 = arith.constant 6 : i32
    %306 = arith.addi %c6_i32_123, %c2_i32 : i32
    %307 = vector.broadcast %306 : i32 to vector<11x1xi32>
    %308 = arith.cmpi eq, %0, %307 : vector<11x1xi32>
    %309 = vector.shape_cast %308 : vector<11x1xi1> to vector<11x1xi1>
    %310 = vector.broadcast %309 : vector<11x1xi1> to vector<11x16xi1>
    %311 = vector.shape_cast %305 : vector<1x16xf32> to vector<1x16xf32>
    %312 = vector.broadcast %311 : vector<1x16xf32> to vector<11x16xf32>
    %313 = arith.select %310, %312, %233 : vector<11x16xi1>, vector<11x16xf32>
    %c0_124 = arith.constant 0 : index
    %c0_125 = arith.constant 0 : index
    %314 = vector.load %arg4[%c0_124, %c0_125] : memref<11x16xf32, #tpu.memory_space<vmem>>, vector<11x16xf32>
    tpu.vector_store %arg4[%c0_124, %c0_125], %313 {strides = array<i32>} : memref<11x16xf32, #tpu.memory_space<vmem>>, vector<11x16xf32>,
    %315 = arith.ori %287, %289 : vector<11x1xi1>
    %316 = vector.broadcast %306 : i32 to vector<11x1xi32>
    %317 = arith.cmpi eq, %0, %316 : vector<11x1xi32>
    %c0_126 = arith.constant 0 : index
    %c0_127 = arith.constant 0 : index
    %318 = vector.load %arg5[%c0_126, %c0_127] : memref<11x1xf32, #tpu.memory_space<vmem>>, vector<11x1xf32>
    %cst_128 = arith.constant 0.000000e+00 : f32
    %319 = vector.broadcast %cst_128 : f32 to vector<11x1xf32>
    %320 = arith.select %317, %319, %318 : vector<11x1xi1>, vector<11x1xf32>
    %321 = vector.broadcast %cst_17 : f32 to vector<11x1xf32>
    %322 = arith.select %315, %321, %320 : vector<11x1xi1>, vector<11x1xf32>
    %c0_129 = arith.constant 0 : index
    %c0_130 = arith.constant 0 : index
    %323 = vector.load %arg5[%c0_129, %c0_130] : memref<11x1xf32, #tpu.memory_space<vmem>>, vector<11x1xf32>
    tpu.vector_store %arg5[%c0_129, %c0_130], %322 {strides = array<i32>} : memref<11x1xf32, #tpu.memory_space<vmem>>, vector<11x1xf32>,
    %324 = vector.broadcast %279 : vector<1x1xi32> to vector<1x11xi32>
    %325 = arith.cmpi eq, %1, %324 : vector<1x11xi32>
    %326 = vector.broadcast %285 : vector<1x1xi32> to vector<1x11xi32>
    %327 = arith.cmpi eq, %1, %326 : vector<1x11xi32>
    %328 = arith.ori %325, %327 : vector<1x11xi1>
    %329 = vector.broadcast %306 : i32 to vector<1x11xi32>
    %330 = arith.cmpi eq, %1, %329 : vector<1x11xi32>
    %c0_131 = arith.constant 0 : index
    %c0_132 = arith.constant 0 : index
    %331 = vector.load %arg6[%c0_131, %c0_132] : memref<1x11xf32, #tpu.memory_space<vmem>>, vector<1x11xf32>
    %cst_133 = arith.constant 0.000000e+00 : f32
    %332 = vector.broadcast %cst_133 : f32 to vector<1x11xf32>
    %333 = arith.select %330, %332, %331 : vector<1x11xi1>, vector<1x11xf32>
    %334 = vector.broadcast %cst_17 : f32 to vector<1x11xf32>
    %335 = arith.select %328, %334, %333 : vector<1x11xi1>, vector<1x11xf32>
    %c0_134 = arith.constant 0 : index
    %c0_135 = arith.constant 0 : index
    %336 = vector.load %arg6[%c0_134, %c0_135] : memref<1x11xf32, #tpu.memory_space<vmem>>, vector<1x11xf32>
    tpu.vector_store %arg6[%c0_134, %c0_135], %335 {strides = array<i32>} : memref<1x11xf32, #tpu.memory_space<vmem>>, vector<1x11xf32>,
    %c3_i32 = arith.constant 3 : i32
    %c0_136 = arith.constant 0 : index
    %c0_137 = arith.constant 0 : index
    %337 = vector.load %arg4[%c0_136, %c0_137] : memref<11x16xf32, #tpu.memory_space<vmem>>, vector<11x16xf32>
    %cst_138 = arith.constant dense<0.000000e+00> : vector<11x11xf32>
    %338 = tpu.matmul %337, %337, %cst_138 {dimension_numbers = #tpu.dot_dimension_numbers<[1], [1], [0], [0], [0, 0, 1, 0], [], []>} : vector<11x16xf32>, vector<11x16xf32>, vector<11x11xf32> -> vector<11x11xf32>
    %339 = arith.cmpi eq, %2, %3 : vector<11x11xi32>
    %cst_139 = arith.constant 0.000000e+00 : f32
    %340 = vector.broadcast %cst_139 : f32 to vector<11x11xf32>
    %341 = arith.select %339, %338, %340 : vector<11x11xi1>, vector<11x11xf32>
    %cst_140 = arith.constant dense<0.000000e+00> : vector<11xf32>
    %342 = vector.multi_reduction <add>, %341, %cst_140 [1] : vector<11x11xf32> to vector<11xf32>
    %343 = vector.shape_cast %342 : vector<11xf32> to vector<11x1xf32>
    %cst_141 = arith.constant dense<0.000000e+00> : vector<11xf32>
    %344 = vector.multi_reduction <add>, %341, %cst_141 [0] : vector<11x11xf32> to vector<11xf32>
    %345 = vector.shape_cast %344 : vector<11xf32> to vector<1x11xf32>
    %346 = vector.broadcast %343 : vector<11x1xf32> to vector<11x11xf32>
    %347 = vector.broadcast %345 : vector<1x11xf32> to vector<11x11xf32>
    %348 = arith.addf %346, %347 : vector<11x11xf32>
    %cst_142 = arith.constant 2.000000e+00 : f32
    %349 = vector.broadcast %cst_142 : f32 to vector<11x11xf32>
    %350 = arith.mulf %349, %338 : vector<11x11xf32>
    %351 = arith.subf %348, %350 : vector<11x11xf32>
    %352 = arith.cmpi eq, %2, %3 : vector<11x11xi32>
    %353 = vector.broadcast %cst_17 : f32 to vector<11x11xf32>
    %354 = arith.select %352, %353, %351 : vector<11x11xi1>, vector<11x11xf32>
    %c0_143 = arith.constant 0 : index
    %c0_144 = arith.constant 0 : index
    %355 = vector.load %arg5[%c0_143, %c0_144] : memref<11x1xf32, #tpu.memory_space<vmem>>, vector<11x1xf32>
    %356 = vector.broadcast %355 : vector<11x1xf32> to vector<11x11xf32>
    %357 = arith.addf %354, %356 : vector<11x11xf32>
    %c0_145 = arith.constant 0 : index
    %c0_146 = arith.constant 0 : index
    %358 = vector.load %arg6[%c0_145, %c0_146] : memref<1x11xf32, #tpu.memory_space<vmem>>, vector<1x11xf32>
    %359 = vector.broadcast %358 : vector<1x11xf32> to vector<11x11xf32>
    %360 = arith.addf %357, %359 : vector<11x11xf32>
    %cst_147 = arith.constant dense<0x7F800000> : vector<11xf32>
    %361 = vector.multi_reduction <minimumf>, %360, %cst_147 [1] : vector<11x11xf32> to vector<11xf32>
    %362 = vector.shape_cast %361 : vector<11xf32> to vector<11x1xf32>
    %cst_148 = arith.constant dense<0x7F800000> : vector<1xf32>
    %363 = vector.multi_reduction <minimumf>, %362, %cst_148 [0] : vector<11x1xf32> to vector<1xf32>
    %364 = vector.shape_cast %363 : vector<1xf32> to vector<1x1xf32>
    %c11_i32_149 = arith.constant 11 : i32
    %365 = vector.broadcast %c11_i32_149 : i32 to vector<11x11xi32>
    %366 = arith.muli %2, %365 : vector<11x11xi32>
    %367 = arith.addi %366, %3 : vector<11x11xi32>
    %368 = vector.broadcast %364 : vector<1x1xf32> to vector<11x11xf32>
    %369 = arith.cmpf oeq, %360, %368 : vector<11x11xf32>
    %c121_i32_150 = arith.constant 121 : i32
    %370 = vector.broadcast %c121_i32_150 : i32 to vector<11x11xi32>
    %371 = arith.select %369, %367, %370 : vector<11x11xi1>, vector<11x11xi32>
    %cst_151 = arith.constant dense<2147483647> : vector<11xi32>
    %372 = vector.multi_reduction <minsi>, %371, %cst_151 [1] : vector<11x11xi32> to vector<11xi32>
    %373 = vector.shape_cast %372 : vector<11xi32> to vector<11x1xi32>
    %cst_152 = arith.constant dense<2147483647> : vector<1xi32>
    %374 = vector.multi_reduction <minsi>, %373, %cst_152 [0] : vector<11x1xi32> to vector<1xi32>
    %375 = vector.shape_cast %374 : vector<1xi32> to vector<1x1xi32>
    %376 = vector.broadcast %375 : vector<1x1xi32> to vector<11x11xi32>
    %377 = arith.cmpi eq, %371, %376 : vector<11x11xi32>
    %c11_i32_153 = arith.constant 11 : i32
    %378 = vector.broadcast %c11_i32_153 : i32 to vector<11x11xi32>
    %379 = arith.select %377, %2, %378 : vector<11x11xi1>, vector<11x11xi32>
    %cst_154 = arith.constant dense<2147483647> : vector<11xi32>
    %380 = vector.multi_reduction <minsi>, %379, %cst_154 [1] : vector<11x11xi32> to vector<11xi32>
    %381 = vector.shape_cast %380 : vector<11xi32> to vector<11x1xi32>
    %cst_155 = arith.constant dense<2147483647> : vector<1xi32>
    %382 = vector.multi_reduction <minsi>, %381, %cst_155 [0] : vector<11x1xi32> to vector<1xi32>
    %383 = vector.shape_cast %382 : vector<1xi32> to vector<1x1xi32>
    %c11_i32_156 = arith.constant 11 : i32
    %384 = vector.broadcast %c11_i32_156 : i32 to vector<11x11xi32>
    %385 = arith.select %377, %3, %384 : vector<11x11xi1>, vector<11x11xi32>
    %cst_157 = arith.constant dense<2147483647> : vector<11xi32>
    %386 = vector.multi_reduction <minsi>, %385, %cst_157 [1] : vector<11x11xi32> to vector<11xi32>
    %387 = vector.shape_cast %386 : vector<11xi32> to vector<11x1xi32>
    %cst_158 = arith.constant dense<2147483647> : vector<1xi32>
    %388 = vector.multi_reduction <minsi>, %387, %cst_158 [0] : vector<11x1xi32> to vector<1xi32>
    %389 = vector.shape_cast %388 : vector<1xi32> to vector<1x1xi32>
    %390 = vector.broadcast %383 : vector<1x1xi32> to vector<11x1xi32>
    %391 = arith.cmpi eq, %0, %390 : vector<11x1xi32>
    %392 = vector.broadcast %389 : vector<1x1xi32> to vector<11x1xi32>
    %393 = arith.cmpi eq, %0, %392 : vector<11x1xi32>
    %cst_159 = arith.constant 0.000000e+00 : f32
    %394 = vector.shape_cast %391 : vector<11x1xi1> to vector<11x1xi1>
    %395 = vector.broadcast %394 : vector<11x1xi1> to vector<11x16xi1>
    %396 = vector.broadcast %cst_159 : f32 to vector<11x16xf32>
    %397 = arith.select %395, %337, %396 : vector<11x16xi1>, vector<11x16xf32>
    %cst_160 = arith.constant dense<0.000000e+00> : vector<16xf32>
    %398 = vector.multi_reduction <add>, %397, %cst_160 [0] : vector<11x16xf32> to vector<16xf32>
    %399 = vector.shape_cast %398 : vector<16xf32> to vector<1x16xf32>
    %cst_161 = arith.constant 0.000000e+00 : f32
    %400 = vector.shape_cast %393 : vector<11x1xi1> to vector<11x1xi1>
    %401 = vector.broadcast %400 : vector<11x1xi1> to vector<11x16xi1>
    %402 = vector.broadcast %cst_161 : f32 to vector<11x16xf32>
    %403 = arith.select %401, %337, %402 : vector<11x16xi1>, vector<11x16xf32>
    %cst_162 = arith.constant dense<0.000000e+00> : vector<16xf32>
    %404 = vector.multi_reduction <add>, %403, %cst_162 [0] : vector<11x16xf32> to vector<16xf32>
    %405 = vector.shape_cast %404 : vector<16xf32> to vector<1x16xf32>
    %406 = arith.mulf %399, %22 : vector<1x16xf32>
    %407 = arith.mulf %405, %23 : vector<1x16xf32>
    %408 = arith.addf %406, %407 : vector<1x16xf32>
    %409 = arith.addf %408, %24 : vector<1x16xf32>
    %c6_i32_163 = arith.constant 6 : i32
    %410 = arith.addi %c6_i32_163, %c3_i32 : i32
    %411 = vector.broadcast %410 : i32 to vector<11x1xi32>
    %412 = arith.cmpi eq, %0, %411 : vector<11x1xi32>
    %413 = vector.shape_cast %412 : vector<11x1xi1> to vector<11x1xi1>
    %414 = vector.broadcast %413 : vector<11x1xi1> to vector<11x16xi1>
    %415 = vector.shape_cast %409 : vector<1x16xf32> to vector<1x16xf32>
    %416 = vector.broadcast %415 : vector<1x16xf32> to vector<11x16xf32>
    %417 = arith.select %414, %416, %337 : vector<11x16xi1>, vector<11x16xf32>
    %c0_164 = arith.constant 0 : index
    %c0_165 = arith.constant 0 : index
    %418 = vector.load %arg4[%c0_164, %c0_165] : memref<11x16xf32, #tpu.memory_space<vmem>>, vector<11x16xf32>
    tpu.vector_store %arg4[%c0_164, %c0_165], %417 {strides = array<i32>} : memref<11x16xf32, #tpu.memory_space<vmem>>, vector<11x16xf32>,
    %419 = arith.ori %391, %393 : vector<11x1xi1>
    %420 = vector.broadcast %410 : i32 to vector<11x1xi32>
    %421 = arith.cmpi eq, %0, %420 : vector<11x1xi32>
    %c0_166 = arith.constant 0 : index
    %c0_167 = arith.constant 0 : index
    %422 = vector.load %arg5[%c0_166, %c0_167] : memref<11x1xf32, #tpu.memory_space<vmem>>, vector<11x1xf32>
    %cst_168 = arith.constant 0.000000e+00 : f32
    %423 = vector.broadcast %cst_168 : f32 to vector<11x1xf32>
    %424 = arith.select %421, %423, %422 : vector<11x1xi1>, vector<11x1xf32>
    %425 = vector.broadcast %cst_17 : f32 to vector<11x1xf32>
    %426 = arith.select %419, %425, %424 : vector<11x1xi1>, vector<11x1xf32>
    %c0_169 = arith.constant 0 : index
    %c0_170 = arith.constant 0 : index
    %427 = vector.load %arg5[%c0_169, %c0_170] : memref<11x1xf32, #tpu.memory_space<vmem>>, vector<11x1xf32>
    tpu.vector_store %arg5[%c0_169, %c0_170], %426 {strides = array<i32>} : memref<11x1xf32, #tpu.memory_space<vmem>>, vector<11x1xf32>,
    %428 = vector.broadcast %383 : vector<1x1xi32> to vector<1x11xi32>
    %429 = arith.cmpi eq, %1, %428 : vector<1x11xi32>
    %430 = vector.broadcast %389 : vector<1x1xi32> to vector<1x11xi32>
    %431 = arith.cmpi eq, %1, %430 : vector<1x11xi32>
    %432 = arith.ori %429, %431 : vector<1x11xi1>
    %433 = vector.broadcast %410 : i32 to vector<1x11xi32>
    %434 = arith.cmpi eq, %1, %433 : vector<1x11xi32>
    %c0_171 = arith.constant 0 : index
    %c0_172 = arith.constant 0 : index
    %435 = vector.load %arg6[%c0_171, %c0_172] : memref<1x11xf32, #tpu.memory_space<vmem>>, vector<1x11xf32>
    %cst_173 = arith.constant 0.000000e+00 : f32
    %436 = vector.broadcast %cst_173 : f32 to vector<1x11xf32>
    %437 = arith.select %434, %436, %435 : vector<1x11xi1>, vector<1x11xf32>
    %438 = vector.broadcast %cst_17 : f32 to vector<1x11xf32>
    %439 = arith.select %432, %438, %437 : vector<1x11xi1>, vector<1x11xf32>
    %c0_174 = arith.constant 0 : index
    %c0_175 = arith.constant 0 : index
    %440 = vector.load %arg6[%c0_174, %c0_175] : memref<1x11xf32, #tpu.memory_space<vmem>>, vector<1x11xf32>
    tpu.vector_store %arg6[%c0_174, %c0_175], %439 {strides = array<i32>} : memref<1x11xf32, #tpu.memory_space<vmem>>, vector<1x11xf32>,
    %c4_i32 = arith.constant 4 : i32
    %c0_176 = arith.constant 0 : index
    %c0_177 = arith.constant 0 : index
    %441 = vector.load %arg4[%c0_176, %c0_177] : memref<11x16xf32, #tpu.memory_space<vmem>>, vector<11x16xf32>
    %cst_178 = arith.constant dense<0.000000e+00> : vector<11x11xf32>
    %442 = tpu.matmul %441, %441, %cst_178 {dimension_numbers = #tpu.dot_dimension_numbers<[1], [1], [0], [0], [0, 0, 1, 0], [], []>} : vector<11x16xf32>, vector<11x16xf32>, vector<11x11xf32> -> vector<11x11xf32>
    %443 = arith.cmpi eq, %2, %3 : vector<11x11xi32>
    %cst_179 = arith.constant 0.000000e+00 : f32
    %444 = vector.broadcast %cst_179 : f32 to vector<11x11xf32>
    %445 = arith.select %443, %442, %444 : vector<11x11xi1>, vector<11x11xf32>
    %cst_180 = arith.constant dense<0.000000e+00> : vector<11xf32>
    %446 = vector.multi_reduction <add>, %445, %cst_180 [1] : vector<11x11xf32> to vector<11xf32>
    %447 = vector.shape_cast %446 : vector<11xf32> to vector<11x1xf32>
    %cst_181 = arith.constant dense<0.000000e+00> : vector<11xf32>
    %448 = vector.multi_reduction <add>, %445, %cst_181 [0] : vector<11x11xf32> to vector<11xf32>
    %449 = vector.shape_cast %448 : vector<11xf32> to vector<1x11xf32>
    %450 = vector.broadcast %447 : vector<11x1xf32> to vector<11x11xf32>
    %451 = vector.broadcast %449 : vector<1x11xf32> to vector<11x11xf32>
    %452 = arith.addf %450, %451 : vector<11x11xf32>
    %cst_182 = arith.constant 2.000000e+00 : f32
    %453 = vector.broadcast %cst_182 : f32 to vector<11x11xf32>
    %454 = arith.mulf %453, %442 : vector<11x11xf32>
    %455 = arith.subf %452, %454 : vector<11x11xf32>
    %456 = arith.cmpi eq, %2, %3 : vector<11x11xi32>
    %457 = vector.broadcast %cst_17 : f32 to vector<11x11xf32>
    %458 = arith.select %456, %457, %455 : vector<11x11xi1>, vector<11x11xf32>
    %c0_183 = arith.constant 0 : index
    %c0_184 = arith.constant 0 : index
    %459 = vector.load %arg5[%c0_183, %c0_184] : memref<11x1xf32, #tpu.memory_space<vmem>>, vector<11x1xf32>
    %460 = vector.broadcast %459 : vector<11x1xf32> to vector<11x11xf32>
    %461 = arith.addf %458, %460 : vector<11x11xf32>
    %c0_185 = arith.constant 0 : index
    %c0_186 = arith.constant 0 : index
    %462 = vector.load %arg6[%c0_185, %c0_186] : memref<1x11xf32, #tpu.memory_space<vmem>>, vector<1x11xf32>
    %463 = vector.broadcast %462 : vector<1x11xf32> to vector<11x11xf32>
    %464 = arith.addf %461, %463 : vector<11x11xf32>
    %cst_187 = arith.constant dense<0x7F800000> : vector<11xf32>
    %465 = vector.multi_reduction <minimumf>, %464, %cst_187 [1] : vector<11x11xf32> to vector<11xf32>
    %466 = vector.shape_cast %465 : vector<11xf32> to vector<11x1xf32>
    %cst_188 = arith.constant dense<0x7F800000> : vector<1xf32>
    %467 = vector.multi_reduction <minimumf>, %466, %cst_188 [0] : vector<11x1xf32> to vector<1xf32>
    %468 = vector.shape_cast %467 : vector<1xf32> to vector<1x1xf32>
    %c11_i32_189 = arith.constant 11 : i32
    %469 = vector.broadcast %c11_i32_189 : i32 to vector<11x11xi32>
    %470 = arith.muli %2, %469 : vector<11x11xi32>
    %471 = arith.addi %470, %3 : vector<11x11xi32>
    %472 = vector.broadcast %468 : vector<1x1xf32> to vector<11x11xf32>
    %473 = arith.cmpf oeq, %464, %472 : vector<11x11xf32>
    %c121_i32_190 = arith.constant 121 : i32
    %474 = vector.broadcast %c121_i32_190 : i32 to vector<11x11xi32>
    %475 = arith.select %473, %471, %474 : vector<11x11xi1>, vector<11x11xi32>
    %cst_191 = arith.constant dense<2147483647> : vector<11xi32>
    %476 = vector.multi_reduction <minsi>, %475, %cst_191 [1] : vector<11x11xi32> to vector<11xi32>
    %477 = vector.shape_cast %476 : vector<11xi32> to vector<11x1xi32>
    %cst_192 = arith.constant dense<2147483647> : vector<1xi32>
    %478 = vector.multi_reduction <minsi>, %477, %cst_192 [0] : vector<11x1xi32> to vector<1xi32>
    %479 = vector.shape_cast %478 : vector<1xi32> to vector<1x1xi32>
    %480 = vector.broadcast %479 : vector<1x1xi32> to vector<11x11xi32>
    %481 = arith.cmpi eq, %475, %480 : vector<11x11xi32>
    %c11_i32_193 = arith.constant 11 : i32
    %482 = vector.broadcast %c11_i32_193 : i32 to vector<11x11xi32>
    %483 = arith.select %481, %2, %482 : vector<11x11xi1>, vector<11x11xi32>
    %cst_194 = arith.constant dense<2147483647> : vector<11xi32>
    %484 = vector.multi_reduction <minsi>, %483, %cst_194 [1] : vector<11x11xi32> to vector<11xi32>
    %485 = vector.shape_cast %484 : vector<11xi32> to vector<11x1xi32>
    %cst_195 = arith.constant dense<2147483647> : vector<1xi32>
    %486 = vector.multi_reduction <minsi>, %485, %cst_195 [0] : vector<11x1xi32> to vector<1xi32>
    %487 = vector.shape_cast %486 : vector<1xi32> to vector<1x1xi32>
    %c11_i32_196 = arith.constant 11 : i32
    %488 = vector.broadcast %c11_i32_196 : i32 to vector<11x11xi32>
    %489 = arith.select %481, %3, %488 : vector<11x11xi1>, vector<11x11xi32>
    %cst_197 = arith.constant dense<2147483647> : vector<11xi32>
    %490 = vector.multi_reduction <minsi>, %489, %cst_197 [1] : vector<11x11xi32> to vector<11xi32>
    %491 = vector.shape_cast %490 : vector<11xi32> to vector<11x1xi32>
    %cst_198 = arith.constant dense<2147483647> : vector<1xi32>
    %492 = vector.multi_reduction <minsi>, %491, %cst_198 [0] : vector<11x1xi32> to vector<1xi32>
    %493 = vector.shape_cast %492 : vector<1xi32> to vector<1x1xi32>
    %494 = vector.broadcast %487 : vector<1x1xi32> to vector<11x1xi32>
    %495 = arith.cmpi eq, %0, %494 : vector<11x1xi32>
    %496 = vector.broadcast %493 : vector<1x1xi32> to vector<11x1xi32>
    %497 = arith.cmpi eq, %0, %496 : vector<11x1xi32>
    %cst_199 = arith.constant 0.000000e+00 : f32
    %498 = vector.shape_cast %495 : vector<11x1xi1> to vector<11x1xi1>
    %499 = vector.broadcast %498 : vector<11x1xi1> to vector<11x16xi1>
    %500 = vector.broadcast %cst_199 : f32 to vector<11x16xf32>
    %501 = arith.select %499, %441, %500 : vector<11x16xi1>, vector<11x16xf32>
    %cst_200 = arith.constant dense<0.000000e+00> : vector<16xf32>
    %502 = vector.multi_reduction <add>, %501, %cst_200 [0] : vector<11x16xf32> to vector<16xf32>
    %503 = vector.shape_cast %502 : vector<16xf32> to vector<1x16xf32>
    %cst_201 = arith.constant 0.000000e+00 : f32
    %504 = vector.shape_cast %497 : vector<11x1xi1> to vector<11x1xi1>
    %505 = vector.broadcast %504 : vector<11x1xi1> to vector<11x16xi1>
    %506 = vector.broadcast %cst_201 : f32 to vector<11x16xf32>
    %507 = arith.select %505, %441, %506 : vector<11x16xi1>, vector<11x16xf32>
    %cst_202 = arith.constant dense<0.000000e+00> : vector<16xf32>
    %508 = vector.multi_reduction <add>, %507, %cst_202 [0] : vector<11x16xf32> to vector<16xf32>
    %509 = vector.shape_cast %508 : vector<16xf32> to vector<1x16xf32>
    %510 = arith.mulf %503, %22 : vector<1x16xf32>
    %511 = arith.mulf %509, %23 : vector<1x16xf32>
    %512 = arith.addf %510, %511 : vector<1x16xf32>
    %513 = arith.addf %512, %24 : vector<1x16xf32>
    %c6_i32_203 = arith.constant 6 : i32
    %514 = arith.addi %c6_i32_203, %c4_i32 : i32
    %515 = vector.broadcast %514 : i32 to vector<11x1xi32>
    %516 = arith.cmpi eq, %0, %515 : vector<11x1xi32>
    %517 = vector.shape_cast %516 : vector<11x1xi1> to vector<11x1xi1>
    %518 = vector.broadcast %517 : vector<11x1xi1> to vector<11x16xi1>
    %519 = vector.shape_cast %513 : vector<1x16xf32> to vector<1x16xf32>
    %520 = vector.broadcast %519 : vector<1x16xf32> to vector<11x16xf32>
    %521 = arith.select %518, %520, %441 : vector<11x16xi1>, vector<11x16xf32>
    %c0_204 = arith.constant 0 : index
    %c0_205 = arith.constant 0 : index
    %522 = vector.load %arg4[%c0_204, %c0_205] : memref<11x16xf32, #tpu.memory_space<vmem>>, vector<11x16xf32>
    tpu.vector_store %arg4[%c0_204, %c0_205], %521 {strides = array<i32>} : memref<11x16xf32, #tpu.memory_space<vmem>>, vector<11x16xf32>,
    %523 = arith.ori %495, %497 : vector<11x1xi1>
    %524 = vector.broadcast %514 : i32 to vector<11x1xi32>
    %525 = arith.cmpi eq, %0, %524 : vector<11x1xi32>
    %c0_206 = arith.constant 0 : index
    %c0_207 = arith.constant 0 : index
    %526 = vector.load %arg5[%c0_206, %c0_207] : memref<11x1xf32, #tpu.memory_space<vmem>>, vector<11x1xf32>
    %cst_208 = arith.constant 0.000000e+00 : f32
    %527 = vector.broadcast %cst_208 : f32 to vector<11x1xf32>
    %528 = arith.select %525, %527, %526 : vector<11x1xi1>, vector<11x1xf32>
    %529 = vector.broadcast %cst_17 : f32 to vector<11x1xf32>
    %530 = arith.select %523, %529, %528 : vector<11x1xi1>, vector<11x1xf32>
    %c0_209 = arith.constant 0 : index
    %c0_210 = arith.constant 0 : index
    %531 = vector.load %arg5[%c0_209, %c0_210] : memref<11x1xf32, #tpu.memory_space<vmem>>, vector<11x1xf32>
    tpu.vector_store %arg5[%c0_209, %c0_210], %530 {strides = array<i32>} : memref<11x1xf32, #tpu.memory_space<vmem>>, vector<11x1xf32>,
    %532 = vector.broadcast %487 : vector<1x1xi32> to vector<1x11xi32>
    %533 = arith.cmpi eq, %1, %532 : vector<1x11xi32>
    %534 = vector.broadcast %493 : vector<1x1xi32> to vector<1x11xi32>
    %535 = arith.cmpi eq, %1, %534 : vector<1x11xi32>
    %536 = arith.ori %533, %535 : vector<1x11xi1>
    %537 = vector.broadcast %514 : i32 to vector<1x11xi32>
    %538 = arith.cmpi eq, %1, %537 : vector<1x11xi32>
    %c0_211 = arith.constant 0 : index
    %c0_212 = arith.constant 0 : index
    %539 = vector.load %arg6[%c0_211, %c0_212] : memref<1x11xf32, #tpu.memory_space<vmem>>, vector<1x11xf32>
    %cst_213 = arith.constant 0.000000e+00 : f32
    %540 = vector.broadcast %cst_213 : f32 to vector<1x11xf32>
    %541 = arith.select %538, %540, %539 : vector<1x11xi1>, vector<1x11xf32>
    %542 = vector.broadcast %cst_17 : f32 to vector<1x11xf32>
    %543 = arith.select %536, %542, %541 : vector<1x11xi1>, vector<1x11xf32>
    %c0_214 = arith.constant 0 : index
    %c0_215 = arith.constant 0 : index
    %544 = vector.load %arg6[%c0_214, %c0_215] : memref<1x11xf32, #tpu.memory_space<vmem>>, vector<1x11xf32>
    tpu.vector_store %arg6[%c0_214, %c0_215], %543 {strides = array<i32>} : memref<1x11xf32, #tpu.memory_space<vmem>>, vector<1x11xf32>,
    %c5_i32 = arith.constant 5 : i32
    %c10 = arith.constant 10 : index
    %c0_216 = arith.constant 0 : index
    %545 = vector.load %arg4[%c10, %c0_216] : memref<11x16xf32, #tpu.memory_space<vmem>>, vector<1x16xf32>
    %c0_217 = arith.constant 0 : index
    %c0_218 = arith.constant 0 : index
    %c0_219 = arith.constant 0 : index
    %546 = vector.load %arg3[%c0_217, %c0_218, %c0_219] : memref<1x1x16xf32, #tpu.memory_space<vmem>>, vector<1x1x16xf32>
    %547 = vector.shape_cast %546 : vector<1x1x16xf32> to vector<1x16xf32>
    %548 = vector.shape_cast %545 : vector<1x16xf32> to vector<1x1x16xf32>
    tpu.vector_store %arg3[%c0_217, %c0_218, %c0_219], %548 {strides = array<i32>} : memref<1x1x16xf32, #tpu.memory_space<vmem>>, vector<1x1x16xf32>,
    return
  }
  func.func @transform_0(%arg0: i32) -> (i32, i32, i32) {
    %c0_i32 = arith.constant 0 : i32
    %c0_i32_0 = arith.constant 0 : i32
    %c0_i32_1 = arith.constant 0 : i32
    return %arg0, %c0_i32, %c0_i32_0 : i32, i32, i32
  }
  func.func @transform_1(%arg0: i32) -> (i32, i32) {
    %c0_i32 = arith.constant 0 : i32
    %c0_i32_0 = arith.constant 0 : i32
    %c0_i32_1 = arith.constant 0 : i32
    return %c0_i32, %c0_i32_0 : i32, i32
  }
  func.func @transform_2(%arg0: i32) -> (i32, i32, i32) {
    %c0_i32 = arith.constant 0 : i32
    %c0_i32_0 = arith.constant 0 : i32
    %c0_i32_1 = arith.constant 0 : i32
    return %arg0, %c0_i32, %c0_i32_0 : i32, i32, i32
  }
}

</mosaic_0001>

<llo_original>
// kernel: tpu_custom_call.1
$region0: #{tpu_custom_call.1}
  #allocation0 [shape = 'u32[]', space=smem, size = 0x4, offset = 0x4, fixed_abs, tag = 'smem constant byte address 0x4 - core index']
  #allocation1 [shape = 'u32[72,128]{1,0:T(1,128)}', space=vmem, size = 0x9000, scoped, tag = 'internal scratch']
  #allocation2 [shape = 'f32[11,16]{1,0:T(8,128)}', space=vmem, size = 0x2000, scoped, tag = 'scratch operand']
  #allocation3 [shape = 'f32[11,1]{1,0:T(8,128)}', space=vmem, size = 0x2000, scoped, tag = 'scratch operand']
  #allocation4 [shape = 'f32[1,11]{1,0:T(1,128)}', space=vmem, size = 0x200, scoped, tag = 'scratch operand']
  %s0 = inlined_call_operand.vmem [shape: f32[2,6,16], index: 0, kind: input, shape index: {}]
  %s1 = inlined_call_operand.vmem [shape: f32[3,16], index: 1, kind: input, shape index: {}]
  %s2 = inlined_call_operand.hbm [shape: f32[2,1,16], index: 2, kind: output, shape index: {}]
  %s3 = sld [smem:[#allocation0]]
  $region41: #{tpu_custom_call.1} parent=0
    _
  %s5 = ssub.s32 1, %s3
  %s6 = scalar_select 0, %s5, %s3
  $region1: #{tpu_custom_call.1} parent=0
    #allocation5 [shape = 'u8[1024]{0}', space=vmem, size = 0x400, scoped, tag = 'output window, operand 0']
    #allocation6 [shape = 's32[2]{0}', space=sflag, size = 0x8, scoped, tag = 'scoped memory for tpu_custom_call.1']
    %7 = vsyncpa [#allocation6], 0
    %s8 = scalar_lea.sflag [#allocation6], 1
    %9 = vsyncpa %s8, 0
    loop: start=0, step=1, limit=4
    $region2: #{tpu_custom_call.1} parent=1 // loop_pre_header
      _
    $region3: #{tpu_custom_call.1} parent=1 // loop_header
      %s11 = sphi 0, %s15
      %p12 = scmp.ge.s32.totalorder %s11, 4
      %s21 = sphi 0, %s23
      %s24 = sphi 0, %s21
      %s25 = sphi 0, %s24
      %s41 = sphi 0, %s25
      %s45 = sphi 0, %s45
      %s47 = sphi 0, %s45
      %s48 = sphi 0, %s47
      %s62 = sphi 0, %s48
      %s68 = sphi 0, %s70
      %s71 = sphi 0, %s68
      %s72 = sphi 0, %s71
      %s88 = sphi 0, %s72
    $region4: #{tpu_custom_call.1} parent=1 // loop_header_branch
      %14 = sbr.rel (%p12) target = $region8
    $region5: #{tpu_custom_call.1} parent=1 // loop_body
      %s16 = ssub.s32 %s11, 1
      %s17 = ssub.s32 %s11, 2
      %s18 = sadd.s32 %s11, 1
      %s19 = ssub.s32 %s11, %s18
      %p20 = scmp.eq.s32.totalorder %s19, 0
      %s22 = sadd.s32 %s21, 1
      %s23 = scalar_select %p20, %s21, %s22
      %p26 = pneg %p20
      %p27 = scmp.eq.s32.totalorder %s11, 1
      %p28 = por %p26, %p27
      %p29 = scmp.ne.s32.totalorder %s21, %s24
      %p30 = scmp.eq.s32.totalorder %s11, 0
      %p31 = por %p29, %p30
      %p32 = scmp.ne.s32.totalorder %s21, %s24
      %p33 = scmp.eq.s32.totalorder %s16, 1
      %p34 = por %p32, %p33
      %p35 = scmp.ne.s32.totalorder %s24, %s25
      %p36 = scmp.eq.s32.totalorder %s16, 0
      %p37 = por %p35, %p36
      %p38 = scmp.ne.s32.totalorder %s24, %s25
      %p39 = scmp.eq.s32.totalorder %s17, 1
      %p40 = por %p38, %p39
      %p42 = scmp.ne.s32.totalorder %s25, %s41
      %p43 = scmp.eq.s32.totalorder %s17, 0
      %p44 = por %p42, %p43
      %s46 = sadd.s32 %s45, 1
      %p49 = scmp.eq.s32.totalorder %s11, 1
      %p50 = scmp.ne.s32.totalorder %s45, %s47
      %p51 = scmp.eq.s32.totalorder %s11, 0
      %p52 = por %p50, %p51
      %p53 = scmp.ne.s32.totalorder %s45, %s47
      %p54 = scmp.eq.s32.totalorder %s16, 1
      %p55 = por %p53, %p54
      %p56 = scmp.ne.s32.totalorder %s47, %s48
      %p57 = scmp.eq.s32.totalorder %s16, 0
      %p58 = por %p56, %p57
      %p59 = scmp.ne.s32.totalorder %s47, %s48
      %p60 = scmp.eq.s32.totalorder %s17, 1
      %p61 = por %p59, %p60
      %p63 = scmp.ne.s32.totalorder %s48, %s62
      %p64 = scmp.eq.s32.totalorder %s17, 0
      %p65 = por %p63, %p64
      %s66 = ssub.s32 %s11, %s18
      %p67 = scmp.eq.s32.totalorder %s66, 0
      %s69 = sadd.s32 %s68, 1
      %s70 = scalar_select %p67, %s68, %s69
      %p73 = pneg %p67
      %p74 = scmp.eq.s32.totalorder %s11, 1
      %p75 = por %p73, %p74
      %p76 = scmp.ne.s32.totalorder %s68, %s71
      %p77 = scmp.eq.s32.totalorder %s11, 0
      %p78 = por %p76, %p77
      %p79 = scmp.ne.s32.totalorder %s68, %s71
      %p80 = scmp.eq.s32.totalorder %s16, 1
      %p81 = por %p79, %p80
      %p82 = scmp.ne.s32.totalorder %s71, %s72
      %p83 = scmp.eq.s32.totalorder %s16, 0
      %p84 = por %p82, %p83
      %p85 = scmp.ne.s32.totalorder %s71, %s72
      %p86 = scmp.eq.s32.totalorder %s17, 1
      %p87 = por %p85, %p86
      %p89 = scmp.ne.s32.totalorder %s72, %s88
      %p90 = scmp.eq.s32.totalorder %s17, 0
      %p91 = por %p89, %p90
      %p92 = scmp.le.s32.totalorder 1, %s11
      %p93 = scmp.lt.s32.totalorder %s11, 3
      %p94 = pnand %p92, %p93
      %p95 = pneg %p94
      // Predicated region
      $region9: #{tpu_custom_call.1} parent=5 // pred_check
        _
      $region10: #{tpu_custom_call.1} parent=5 // pred_check_branch
        %97 = sbr.rel (%p94) target = $region12
      $region11: #{tpu_custom_call.1} parent=5 // pred_region
        %s98 = ssub.s32 %s11, 1
        // Predicated region
        $region13: #{tpu_custom_call.1} parent=11 // pred_check
          %p99 = pneg %p58
        $region14: #{tpu_custom_call.1} parent=11 // pred_check_branch
          %101 = sbr.rel (%p99) target = $region16
        $region15: #{tpu_custom_call.1} parent=11 // pred_region
          _
        $region16: #{tpu_custom_call.1} parent=11 // pred_fallthru
          _
      $region12: #{tpu_custom_call.1} parent=5 // pred_fallthru
        _
      %p102 = scmp.lt.s32.totalorder %s11, 2
      // Predicated region
      $region17: #{tpu_custom_call.1} parent=5 // pred_check
        %p103 = pneg %p102
      $region18: #{tpu_custom_call.1} parent=5 // pred_check_branch
        %105 = sbr.rel (%p103) target = $region20
      $region19: #{tpu_custom_call.1} parent=5 // pred_region
        // Predicated region
        $region21: #{tpu_custom_call.1} parent=19 // pred_check
          %p106 = pneg %p31
        $region22: #{tpu_custom_call.1} parent=19 // pred_check_branch
          %108 = sbr.rel (%p106) target = $region24
        $region23: #{tpu_custom_call.1} parent=19 // pred_region
          %p109 = scmp.lt.s32.totalorder %s11, 1
          %s110 = scalar_select %p109, %s11, 1
          %s111 = smul.addr %s110, 8
          %s112 = scalar_lea.vmem %s0, %s111
        $region24: #{tpu_custom_call.1} parent=19 // pred_fallthru
          _
      $region20: #{tpu_custom_call.1} parent=5 // pred_fallthru
        _
      %p113 = scmp.le.s32.totalorder 1, %s11
      %p114 = scmp.lt.s32.totalorder %s11, 3
      %p115 = pnand %p113, %p114
      %p116 = pneg %p115
      // Predicated region
      $region25: #{tpu_custom_call.1} parent=5 // pred_check
        _
      $region26: #{tpu_custom_call.1} parent=5 // pred_check_branch
        %118 = sbr.rel (%p115) target = $region28
      $region27: #{tpu_custom_call.1} parent=5 // pred_region
        %s119 = ssub.s32 %s11, 1
        %p120 = scmp.lt.s32.totalorder %s16, 1
        %s121 = scalar_select %p120, %s16, 1
        %s122 = smul.addr %s121, 8
        %s123 = scalar_lea.vmem %s0, %s122
        %p124 = pneg %p37
        %p125 = pneg %p34
        %p126 = pneg %p58
        %p127 = pneg %p55
        %p128 = pneg %p84
        %p129 = pneg %p81
        %s130 = sand.u32 %s71, 1
        %s131 = scalar_lea.sflag [#allocation6], %s130
        %s132 = sand.u32 %s71, 1
        %s133 = scalar_lea.vmem [#allocation5], %s132
        %p134 = scmp.lt.s32.totalorder %s16, 1
        %s135 = scalar_select %p134, %s16, 1
        %s136 = smul.addr %s135, 8
        %s137 = scalar_lea.vmem %s0, %s136
        %v138 = vlaneseq
        %v139 = vshrl.u32 %v138, 7
        %v140 = vadd.s32 %v139, 8
        %v141 = vlaneseq
        %v142 = vand.u32 %v141, 127
        %vm143 = vcmask 130048
        %144 = vst.msk [vmem:[#allocation2] sm:$0xff] %vm143, 0.0
        %vm145 = vcmask 124928
        %146 = vst.msk [vmem:[#allocation2 + $0x8] sm:$0x7] %vm145, 0.0
        %v147 = vld [vmem:[%s137] sm:$0x3f]
        %vm148 = vcmask 128000
        %149 = vst.msk [vmem:[#allocation2] sm:$0x3f] %vm148, %v147
        %vm150 = vcmp.lt.s32.totalorder %v139, 6
        %vm151 = vcmp.lt.s32.totalorder %v140, 6
        %v152 = vsel %vm150, 0.0, inf
        %v153 = vsel %vm151, 0.0, inf
        %vm154 = vcmask 7168
        %155 = vst.msk [vmem:[#allocation3] sm:$0xff] %vm154, %v152
        %vm156 = vcmask 2048
        %157 = vst.msk [vmem:[#allocation3 + $0x8] sm:$0x7] %vm156, %v153
        %vm158 = vcmp.lt.s32.totalorder %v142, 6
        %v159 = vsel %vm158, 0.0, inf
        %vm160 = vcmask 81920
        %161 = vst.msk [vmem:[#allocation4] sm:$0x1] %vm160, %v159
        %v162 = vld [vmem:[%s1] sm:$0x7]
        %v163 = vld [vmem:[#allocation2] sm:$0xff]
        %v164 = vld [vmem:[#allocation2 + $0x8] sm:$0x7]
        %v166 = vsel %vm143, %v163, 0
        %v169 = vsel %vm143, %v164, 0
        %171 = vmatpush.xpose.msra.mxu0 0.0
        %172 = vmatpush.xpose.msra.mxu0 0.0
        %173 = vmatpush.xpose.msra.mxu0 0.0
        %174 = vmatpush.xpose.msra.mxu0 0.0
        %175 = vmatpush.xpose.msra.mxu0 0.0
        %176 = vmatpush.xpose.msra.mxu0 0.0
        %177 = vmatpush.xpose.msra.mxu0 0.0
        %178 = vmatpush.xpose.msra.mxu0 0.0
        %179 = vmatpush.xpose.msra.mxu0 0.0
        %180 = vmatpush.xpose.msra.mxu0 0.0
        %181 = vmatpush.xpose.msra.mxu0 0.0
        %182 = vmatpush.xpose.msra.mxu0 0.0
        %183 = vmatpush.xpose.msra.mxu0 0.0
        %184 = vmatpush.xpose.msra.mxu0 0.0
        %185 = vmatpush.xpose.msra.mxu0 %v169
        %186 = vmatpush.xpose.msra.mxu0 %v166
        %187 = vmatmul.f32.gmra.mxu0 %v166
        %v188 = vpop.f32.mrf.mxu0
        %v189 = vadd.f32 0.0, %v188
        %190 = vmatmul.f32.gmra.mxu0 %v169
        %v191 = vpop.f32.mrf.mxu0
        %v192 = vadd.f32 0.0, %v191
        %193 = vdwg.mxu0
        %vm194 = vcmp.eq.s32.totalorder %v139, %v142
        %vm195 = vcmp.eq.s32.totalorder %v140, %v142
        %v196 = vsel %vm194, %v189, 0.0
        %v197 = vsel %vm195, %v192, 0.0
        %vm198 = vcmask 89088
        %v199 = vsel %vm198, %v196, 0.0
        %200 = vadd.xlane.f32.xlu0 %v199
        %v201 = vpop.xlane.xlu0 %200
        %vm202 = vcmask 83968
        %v203 = vsel %vm202, %v197, 0.0
        %204 = vadd.xlane.f32.xlu0 %v203
        %v205 = vpop.xlane.xlu0 %204
        %v206 = vadd.f32 %v199, %v203
        %v207 = vrot.slane %v206, 4
        %v208 = vadd.f32 %v206, %v207
        %v209 = vrot.slane %v208, 2
        %v210 = vadd.f32 %v208, %v209
        %v211 = vrot.slane %v210, 1
        %v212 = vadd.f32 %v210, %v211
        %v213 = vadd.f32 %v201, %v212
        %v214 = vadd.f32 %v205, %v212
        %v215 = vmul.f32 %v189, 2.0
        %v216 = vmul.f32 %v192, 2.0
        %v217 = vsub.f32 %v213, %v215
        %v218 = vsub.f32 %v214, %v216
        %v219 = vsel %vm194, inf, %v217
        %v220 = vsel %vm195, inf, %v218
        %v221 = vld [vmem:[#allocation3] sm:$0xff]
        %v222 = vld [vmem:[#allocation3 + $0x8] sm:$0x7]
        %224 = vset.pattern.permute.xlu0 0
        %225 = vperm.xlu0 %224, %v221
        %v226 = vpop.permute.xlu0 %225
        %229 = vset.pattern.permute.xlu0 0
        %230 = vperm.xlu0 %229, %v222
        %v231 = vpop.permute.xlu0 %230
        %v233 = vadd.f32 %v219, %v226
        %v234 = vadd.f32 %v220, %v231
        %v235 = vld [vmem:[#allocation4] sm:$0x1]
        %v237 = vperm.slane %v235, 0
        %v239 = vadd.f32 %v233, %v237
        %v240 = vadd.f32 %v234, %v237
        %v241 = vsel %vm198, %v239, inf
        %242 = vmin.xlane.f32.xlu0 %v241
        %v243 = vpop.xlane.xlu0 %242
        %v244 = vsel %vm202, %v240, inf
        %245 = vmin.xlane.f32.xlu0 %v244
        %v246 = vpop.xlane.xlu0 %245
        %vm247 = vcmask 1042432
        %v248 = vsel %vm247, %v246, inf
        %v249 = vmin.f32 %v243, %v248
        %v250 = vrot.slane %v249, 4
        %v251 = vmin.f32 %v249, %v250
        %v252 = vrot.slane %v251, 2
        %v253 = vmin.f32 %v251, %v252
        %v254 = vrot.slane %v253, 1
        %v255 = vmin.f32 %v253, %v254
        %v256 = vmul.u32 %v139, 11
        %v257 = vmul.u32 %v140, 11
        %v258 = vadd.s32 %v256, %v142
        %v259 = vadd.s32 %v257, %v142
        %vm260 = vcmp.eq.f32.partialorder %v239, %v255
        %vm261 = vcmp.eq.f32.partialorder %v240, %v255
        %v262 = vsel %vm260, %v258, 121
        %v263 = vsel %vm261, %v259, 121
        %v264 = vsel %vm198, %v262, 2147483647
        %v265 = vand.u32 %v264, 65535
        %v266 = vshra.s32 %v264, 16
        %v267 = vcvt.s32.f32 %v265
        %v268 = vcvt.s32.f32 %v266
        %269 = vmin.xlane.f32.xlu0 %v268
        %v270 = vpop.xlane.xlu0 %269
        %vm271 = vcmp.eq.f32.partialorder %v268, %v270
        %v272 = vsel %vm271, %v267, inf
        %273 = vmin.xlane.f32.xlu0 %v272
        %v274 = vpop.xlane.xlu0 %273
        %v275 = vcvt.f32.s32 %v274
        %v276 = vcvt.f32.s32 %v270
        %v277 = vshll.u32 %v276, 16
        %v278 = vadd.s32 %v277, %v275
        %v279 = vsel %vm202, %v263, 2147483647
        %v280 = vand.u32 %v279, 65535
        %v281 = vshra.s32 %v279, 16
        %v282 = vcvt.s32.f32 %v280
        %v283 = vcvt.s32.f32 %v281
        %284 = vmin.xlane.f32.xlu0 %v283
        %v285 = vpop.xlane.xlu0 %284
        %vm286 = vcmp.eq.f32.partialorder %v283, %v285
        %v287 = vsel %vm286, %v282, inf
        %288 = vmin.xlane.f32.xlu0 %v287
        %v289 = vpop.xlane.xlu0 %288
        %v290 = vcvt.f32.s32 %v289
        %v291 = vcvt.f32.s32 %v285
        %v292 = vshll.u32 %v291, 16
        %v293 = vadd.s32 %v292, %v290
        %v294 = vsel %vm247, %v293, 2147483647
        %vm295 = vcmp.lt.s32.totalorder %v278, %v294
        %v296 = vsel %vm295, %v278, %v294
        %v297 = vrot.slane %v296, 4
        %vm298 = vcmp.lt.s32.totalorder %v296, %v297
        %v299 = vsel %vm298, %v296, %v297
        %v300 = vrot.slane %v299, 2
        %vm301 = vcmp.lt.s32.totalorder %v299, %v300
        %v302 = vsel %vm301, %v299, %v300
        %v303 = vrot.slane %v302, 1
        %vm304 = vcmp.lt.s32.totalorder %v302, %v303
        %v305 = vsel %vm304, %v302, %v303
        %vm306 = vcmp.eq.s32.totalorder %v262, %v305
        %vm307 = vcmp.eq.s32.totalorder %v263, %v305
        %v308 = vsel %vm306, %v139, 11
        %v309 = vsel %vm307, %v140, 11
        %v310 = vsel %vm198, %v308, 2147483647
        %v311 = vand.u32 %v310, 65535
        %v312 = vshra.s32 %v310, 16
        %v313 = vcvt.s32.f32 %v311
        %v314 = vcvt.s32.f32 %v312
        %315 = vmin.xlane.f32.xlu0 %v314
        %v316 = vpop.xlane.xlu0 %315
        %vm317 = vcmp.eq.f32.partialorder %v314, %v316
        %v318 = vsel %vm317, %v313, inf
        %319 = vmin.xlane.f32.xlu0 %v318
        %v320 = vpop.xlane.xlu0 %319
        %v321 = vcvt.f32.s32 %v320
        %v322 = vcvt.f32.s32 %v316
        %v323 = vshll.u32 %v322, 16
        %v324 = vadd.s32 %v323, %v321
        %v325 = vsel %vm202, %v309, 2147483647
        %v326 = vand.u32 %v325, 65535
        %v327 = vshra.s32 %v325, 16
        %v328 = vcvt.s32.f32 %v326
        %v329 = vcvt.s32.f32 %v327
        %330 = vmin.xlane.f32.xlu0 %v329
        %v331 = vpop.xlane.xlu0 %330
        %vm332 = vcmp.eq.f32.partialorder %v329, %v331
        %v333 = vsel %vm332, %v328, inf
        %334 = vmin.xlane.f32.xlu0 %v333
        %v335 = vpop.xlane.xlu0 %334
        %v336 = vcvt.f32.s32 %v335
        %v337 = vcvt.f32.s32 %v331
        %v338 = vshll.u32 %v337, 16
        %v339 = vadd.s32 %v338, %v336
        %v340 = vsel %vm247, %v339, 2147483647
        %vm341 = vcmp.lt.s32.totalorder %v324, %v340
        %v342 = vsel %vm341, %v324, %v340
        %v343 = vrot.slane %v342, 4
        %vm344 = vcmp.lt.s32.totalorder %v342, %v343
        %v345 = vsel %vm344, %v342, %v343
        %v346 = vrot.slane %v345, 2
        %vm347 = vcmp.lt.s32.totalorder %v345, %v346
        %v348 = vsel %vm347, %v345, %v346
        %v349 = vrot.slane %v348, 1
        %vm350 = vcmp.lt.s32.totalorder %v348, %v349
        %v351 = vsel %vm350, %v348, %v349
        %v352 = vsel %vm306, %v142, 11
        %v353 = vsel %vm307, %v142, 11
        %v354 = vsel %vm198, %v352, 2147483647
        %v355 = vand.u32 %v354, 65535
        %v356 = vshra.s32 %v354, 16
        %v357 = vcvt.s32.f32 %v355
        %v358 = vcvt.s32.f32 %v356
        %359 = vmin.xlane.f32.xlu0 %v358
        %v360 = vpop.xlane.xlu0 %359
        %vm361 = vcmp.eq.f32.partialorder %v358, %v360
        %v362 = vsel %vm361, %v357, inf
        %363 = vmin.xlane.f32.xlu0 %v362
        %v364 = vpop.xlane.xlu0 %363
        %v365 = vcvt.f32.s32 %v364
        %v366 = vcvt.f32.s32 %v360
        %v367 = vshll.u32 %v366, 16
        %v368 = vadd.s32 %v367, %v365
        %v369 = vsel %vm202, %v353, 2147483647
        %v370 = vand.u32 %v369, 65535
        %v371 = vshra.s32 %v369, 16
        %v372 = vcvt.s32.f32 %v370
        %v373 = vcvt.s32.f32 %v371
        %374 = vmin.xlane.f32.xlu0 %v373
        %v375 = vpop.xlane.xlu0 %374
        %vm376 = vcmp.eq.f32.partialorder %v373, %v375
        %v377 = vsel %vm376, %v372, inf
        %378 = vmin.xlane.f32.xlu0 %v377
        %v379 = vpop.xlane.xlu0 %378
        %v380 = vcvt.f32.s32 %v379
        %v381 = vcvt.f32.s32 %v375
        %v382 = vshll.u32 %v381, 16
        %v383 = vadd.s32 %v382, %v380
        %v384 = vsel %vm247, %v383, 2147483647
        %vm385 = vcmp.lt.s32.totalorder %v368, %v384
        %v386 = vsel %vm385, %v368, %v384
        %v387 = vrot.slane %v386, 4
        %vm388 = vcmp.lt.s32.totalorder %v386, %v387
        %v389 = vsel %vm388, %v386, %v387
        %v390 = vrot.slane %v389, 2
        %vm391 = vcmp.lt.s32.totalorder %v389, %v390
        %v392 = vsel %vm391, %v389, %v390
        %v393 = vrot.slane %v392, 1
        %vm394 = vcmp.lt.s32.totalorder %v392, %v393
        %v395 = vsel %vm394, %v392, %v393
        %vm396 = vcmp.eq.s32.totalorder %v139, %v351
        %vm397 = vcmp.eq.s32.totalorder %v140, %v351
        %vm398 = vcmp.eq.s32.totalorder %v139, %v395
        %vm399 = vcmp.eq.s32.totalorder %v140, %v395
        %v400 = vsel %vm396, 1, 0
        %v401 = vsel %vm397, 1, 0
        %vm402 = vcmp.eq.s32.totalorder %v400, 1
        %vm403 = vcmp.eq.s32.totalorder %v401, 1
        %v404 = vsel %vm402, %v163, 0.0
        %v405 = vsel %vm403, %v164, 0.0
        %v406 = vsel %vm143, %v404, 0.0
        %v407 = vsel %vm145, %v405, 0.0
        %v408 = vadd.f32 %v406, %v407
        %v409 = vrot.slane %v408, 4
        %v410 = vadd.f32 %v408, %v409
        %v411 = vrot.slane %v410, 2
        %v412 = vadd.f32 %v410, %v411
        %v413 = vrot.slane %v412, 1
        %v414 = vadd.f32 %v412, %v413
        %v415 = vsel %vm398, 1, 0
        %v416 = vsel %vm399, 1, 0
        %vm417 = vcmp.eq.s32.totalorder %v415, 1
        %vm418 = vcmp.eq.s32.totalorder %v416, 1
        %v419 = vsel %vm417, %v163, 0.0
        %v420 = vsel %vm418, %v164, 0.0
        %v421 = vsel %vm143, %v419, 0.0
        %v422 = vsel %vm145, %v420, 0.0
        %v423 = vadd.f32 %v421, %v422
        %v424 = vrot.slane %v423, 4
        %v425 = vadd.f32 %v423, %v424
        %v426 = vrot.slane %v425, 2
        %v427 = vadd.f32 %v425, %v426
        %v428 = vrot.slane %v427, 1
        %v429 = vadd.f32 %v427, %v428
        %v430 = vmul.f32 %v414, %v162
        %v431 = vmul.f32 %v429, %v162
        %v433 = vrot.slane %v431, 1
        %v435 = vadd.f32 %v430, %v433
        %v437 = vrot.slane %v162, 2
        %v439 = vadd.f32 %v435, %v437
        %vm440 = vcmp.eq.s32.totalorder %v139, 6
        %vm441 = vcmp.eq.s32.totalorder %v140, 6
        %v442 = vsel %vm440, 1, 0
        %v443 = vsel %vm441, 1, 0
        %vm444 = vcmp.eq.s32.totalorder %v442, 1
        %vm445 = vcmp.eq.s32.totalorder %v443, 1
        %v446 = vperm.slane %v439, 0
        %v447 = vsel %vm444, %v446, %v163
        %v448 = vsel %vm445, %v446, %v164
        %449 = vst.msk [vmem:[#allocation2] sm:$0xff] %vm143, %v447
        %450 = vst.msk [vmem:[#allocation2 + $0x8] sm:$0x7] %vm145, %v448
        %vm451 = vmor %vm396, %vm398
        %vm452 = vmor %vm397, %vm399
        %v453 = vld [vmem:[#allocation3] sm:$0xff]
        %v454 = vld [vmem:[#allocation3 + $0x8] sm:$0x7]
        %v455 = vsel %vm440, 0.0, %v453
        %v456 = vsel %vm441, 0.0, %v454
        %v457 = vsel %vm451, inf, %v455
        %v458 = vsel %vm452, inf, %v456
        %459 = vst.msk [vmem:[#allocation3] sm:$0xff] %vm154, %v457
        %460 = vst.msk [vmem:[#allocation3 + $0x8] sm:$0x7] %vm156, %v458
        %vm461 = vcmp.eq.s32.totalorder %v142, %v351
        %vm462 = vcmp.eq.s32.totalorder %v142, %v395
        %vm463 = vmor %vm461, %vm462
        %vm464 = vcmp.eq.s32.totalorder %v142, 6
        %v465 = vld [vmem:[#allocation4] sm:$0x1]
        %v466 = vsel %vm464, 0.0, %v465
        %v467 = vsel %vm463, inf, %v466
        %468 = vst.msk [vmem:[#allocation4] sm:$0x1] %vm160, %v467
        %v469 = vld [vmem:[#allocation2] sm:$0xff]
        %v470 = vld [vmem:[#allocation2 + $0x8] sm:$0x7]
        %v472 = vsel %vm143, %v469, 0
        %v475 = vsel %vm143, %v470, 0
        %477 = vmatpush.xpose.msra.mxu0 0.0
        %478 = vmatpush.xpose.msra.mxu0 0.0
        %479 = vmatpush.xpose.msra.mxu0 0.0
        %480 = vmatpush.xpose.msra.mxu0 0.0
        %481 = vmatpush.xpose.msra.mxu0 0.0
        %482 = vmatpush.xpose.msra.mxu0 0.0
        %483 = vmatpush.xpose.msra.mxu0 0.0
        %484 = vmatpush.xpose.msra.mxu0 0.0
        %485 = vmatpush.xpose.msra.mxu0 0.0
        %486 = vmatpush.xpose.msra.mxu0 0.0
        %487 = vmatpush.xpose.msra.mxu0 0.0
        %488 = vmatpush.xpose.msra.mxu0 0.0
        %489 = vmatpush.xpose.msra.mxu0 0.0
        %490 = vmatpush.xpose.msra.mxu0 0.0
        %491 = vmatpush.xpose.msra.mxu0 %v475
        %492 = vmatpush.xpose.msra.mxu0 %v472
        %493 = vmatmul.f32.gmra.mxu0 %v472
        %v494 = vpop.f32.mrf.mxu0
        %v495 = vadd.f32 0.0, %v494
        %496 = vmatmul.f32.gmra.mxu0 %v475
        %v497 = vpop.f32.mrf.mxu0
        %v498 = vadd.f32 0.0, %v497
        %499 = vdwg.mxu0
        %v500 = vsel %vm194, %v495, 0.0
        %v501 = vsel %vm195, %v498, 0.0
        %v502 = vsel %vm198, %v500, 0.0
        %503 = vadd.xlane.f32.xlu0 %v502
        %v504 = vpop.xlane.xlu0 %503
        %v505 = vsel %vm202, %v501, 0.0
        %506 = vadd.xlane.f32.xlu0 %v505
        %v507 = vpop.xlane.xlu0 %506
        %v508 = vadd.f32 %v502, %v505
        %v509 = vrot.slane %v508, 4
        %v510 = vadd.f32 %v508, %v509
        %v511 = vrot.slane %v510, 2
        %v512 = vadd.f32 %v510, %v511
        %v513 = vrot.slane %v512, 1
        %v514 = vadd.f32 %v512, %v513
        %v515 = vadd.f32 %v504, %v514
        %v516 = vadd.f32 %v507, %v514
        %v517 = vmul.f32 %v495, 2.0
        %v518 = vmul.f32 %v498, 2.0
        %v519 = vsub.f32 %v515, %v517
        %v520 = vsub.f32 %v516, %v518
        %v521 = vsel %vm194, inf, %v519
        %v522 = vsel %vm195, inf, %v520
        %v523 = vld [vmem:[#allocation3] sm:$0xff]
        %v524 = vld [vmem:[#allocation3 + $0x8] sm:$0x7]
        %526 = vset.pattern.permute.xlu0 0
        %527 = vperm.xlu0 %526, %v523
        %v528 = vpop.permute.xlu0 %527
        %531 = vset.pattern.permute.xlu0 0
        %532 = vperm.xlu0 %531, %v524
        %v533 = vpop.permute.xlu0 %532
        %v535 = vadd.f32 %v521, %v528
        %v536 = vadd.f32 %v522, %v533
        %v537 = vld [vmem:[#allocation4] sm:$0x1]
        %v539 = vperm.slane %v537, 0
        %v541 = vadd.f32 %v535, %v539
        %v542 = vadd.f32 %v536, %v539
        %v543 = vsel %vm198, %v541, inf
        %544 = vmin.xlane.f32.xlu0 %v543
        %v545 = vpop.xlane.xlu0 %544
        %v546 = vsel %vm202, %v542, inf
        %547 = vmin.xlane.f32.xlu0 %v546
        %v548 = vpop.xlane.xlu0 %547
        %v549 = vsel %vm247, %v548, inf
        %v550 = vmin.f32 %v545, %v549
        %v551 = vrot.slane %v550, 4
        %v552 = vmin.f32 %v550, %v551
        %v553 = vrot.slane %v552, 2
        %v554 = vmin.f32 %v552, %v553
        %v555 = vrot.slane %v554, 1
        %v556 = vmin.f32 %v554, %v555
        %vm557 = vcmp.eq.f32.partialorder %v541, %v556
        %vm558 = vcmp.eq.f32.partialorder %v542, %v556
        %v559 = vsel %vm557, %v258, 121
        %v560 = vsel %vm558, %v259, 121
        %v561 = vsel %vm198, %v559, 2147483647
        %v562 = vand.u32 %v561, 65535
        %v563 = vshra.s32 %v561, 16
        %v564 = vcvt.s32.f32 %v562
        %v565 = vcvt.s32.f32 %v563
        %566 = vmin.xlane.f32.xlu0 %v565
        %v567 = vpop.xlane.xlu0 %566
        %vm568 = vcmp.eq.f32.partialorder %v565, %v567
        %v569 = vsel %vm568, %v564, inf
        %570 = vmin.xlane.f32.xlu0 %v569
        %v571 = vpop.xlane.xlu0 %570
        %v572 = vcvt.f32.s32 %v571
        %v573 = vcvt.f32.s32 %v567
        %v574 = vshll.u32 %v573, 16
        %v575 = vadd.s32 %v574, %v572
        %v576 = vsel %vm202, %v560, 2147483647
        %v577 = vand.u32 %v576, 65535
        %v578 = vshra.s32 %v576, 16
        %v579 = vcvt.s32.f32 %v577
        %v580 = vcvt.s32.f32 %v578
        %581 = vmin.xlane.f32.xlu0 %v580
        %v582 = vpop.xlane.xlu0 %581
        %vm583 = vcmp.eq.f32.partialorder %v580, %v582
        %v584 = vsel %vm583, %v579, inf
        %585 = vmin.xlane.f32.xlu0 %v584
        %v586 = vpop.xlane.xlu0 %585
        %v587 = vcvt.f32.s32 %v586
        %v588 = vcvt.f32.s32 %v582
        %v589 = vshll.u32 %v588, 16
        %v590 = vadd.s32 %v589, %v587
        %v591 = vsel %vm247, %v590, 2147483647
        %vm592 = vcmp.lt.s32.totalorder %v575, %v591
        %v593 = vsel %vm592, %v575, %v591
        %v594 = vrot.slane %v593, 4
        %vm595 = vcmp.lt.s32.totalorder %v593, %v594
        %v596 = vsel %vm595, %v593, %v594
        %v597 = vrot.slane %v596, 2
        %vm598 = vcmp.lt.s32.totalorder %v596, %v597
        %v599 = vsel %vm598, %v596, %v597
        %v600 = vrot.slane %v599, 1
        %vm601 = vcmp.lt.s32.totalorder %v599, %v600
        %v602 = vsel %vm601, %v599, %v600
        %vm603 = vcmp.eq.s32.totalorder %v559, %v602
        %vm604 = vcmp.eq.s32.totalorder %v560, %v602
        %v605 = vsel %vm603, %v139, 11
        %v606 = vsel %vm604, %v140, 11
        %v607 = vsel %vm198, %v605, 2147483647
        %v608 = vand.u32 %v607, 65535
        %v609 = vshra.s32 %v607, 16
        %v610 = vcvt.s32.f32 %v608
        %v611 = vcvt.s32.f32 %v609
        %612 = vmin.xlane.f32.xlu0 %v611
        %v613 = vpop.xlane.xlu0 %612
        %vm614 = vcmp.eq.f32.partialorder %v611, %v613
        %v615 = vsel %vm614, %v610, inf
        %616 = vmin.xlane.f32.xlu0 %v615
        %v617 = vpop.xlane.xlu0 %616
        %v618 = vcvt.f32.s32 %v617
        %v619 = vcvt.f32.s32 %v613
        %v620 = vshll.u32 %v619, 16
        %v621 = vadd.s32 %v620, %v618
        %v622 = vsel %vm202, %v606, 2147483647
        %v623 = vand.u32 %v622, 65535
        %v624 = vshra.s32 %v622, 16
        %v625 = vcvt.s32.f32 %v623
        %v626 = vcvt.s32.f32 %v624
        %627 = vmin.xlane.f32.xlu0 %v626
        %v628 = vpop.xlane.xlu0 %627
        %vm629 = vcmp.eq.f32.partialorder %v626, %v628
        %v630 = vsel %vm629, %v625, inf
        %631 = vmin.xlane.f32.xlu0 %v630
        %v632 = vpop.xlane.xlu0 %631
        %v633 = vcvt.f32.s32 %v632
        %v634 = vcvt.f32.s32 %v628
        %v635 = vshll.u32 %v634, 16
        %v636 = vadd.s32 %v635, %v633
        %v637 = vsel %vm247, %v636, 2147483647
        %vm638 = vcmp.lt.s32.totalorder %v621, %v637
        %v639 = vsel %vm638, %v621, %v637
        %v640 = vrot.slane %v639, 4
        %vm641 = vcmp.lt.s32.totalorder %v639, %v640
        %v642 = vsel %vm641, %v639, %v640
        %v643 = vrot.slane %v642, 2
        %vm644 = vcmp.lt.s32.totalorder %v642, %v643
        %v645 = vsel %vm644, %v642, %v643
        %v646 = vrot.slane %v645, 1
        %vm647 = vcmp.lt.s32.totalorder %v645, %v646
        %v648 = vsel %vm647, %v645, %v646
        %v649 = vsel %vm603, %v142, 11
        %v650 = vsel %vm604, %v142, 11
        %v651 = vsel %vm198, %v649, 2147483647
        %v652 = vand.u32 %v651, 65535
        %v653 = vshra.s32 %v651, 16
        %v654 = vcvt.s32.f32 %v652
        %v655 = vcvt.s32.f32 %v653
        %656 = vmin.xlane.f32.xlu0 %v655
        %v657 = vpop.xlane.xlu0 %656
        %vm658 = vcmp.eq.f32.partialorder %v655, %v657
        %v659 = vsel %vm658, %v654, inf
        %660 = vmin.xlane.f32.xlu0 %v659
        %v661 = vpop.xlane.xlu0 %660
        %v662 = vcvt.f32.s32 %v661
        %v663 = vcvt.f32.s32 %v657
        %v664 = vshll.u32 %v663, 16
        %v665 = vadd.s32 %v664, %v662
        %v666 = vsel %vm202, %v650, 2147483647
        %v667 = vand.u32 %v666, 65535
        %v668 = vshra.s32 %v666, 16
        %v669 = vcvt.s32.f32 %v667
        %v670 = vcvt.s32.f32 %v668
        %671 = vmin.xlane.f32.xlu0 %v670
        %v672 = vpop.xlane.xlu0 %671
        %vm673 = vcmp.eq.f32.partialorder %v670, %v672
        %v674 = vsel %vm673, %v669, inf
        %675 = vmin.xlane.f32.xlu0 %v674
        %v676 = vpop.xlane.xlu0 %675
        %v677 = vcvt.f32.s32 %v676
        %v678 = vcvt.f32.s32 %v672
        %v679 = vshll.u32 %v678, 16
        %v680 = vadd.s32 %v679, %v677
        %v681 = vsel %vm247, %v680, 2147483647
        %vm682 = vcmp.lt.s32.totalorder %v665, %v681
        %v683 = vsel %vm682, %v665, %v681
        %v684 = vrot.slane %v683, 4
        %vm685 = vcmp.lt.s32.totalorder %v683, %v684
        %v686 = vsel %vm685, %v683, %v684
        %v687 = vrot.slane %v686, 2
        %vm688 = vcmp.lt.s32.totalorder %v686, %v687
        %v689 = vsel %vm688, %v686, %v687
        %v690 = vrot.slane %v689, 1
        %vm691 = vcmp.lt.s32.totalorder %v689, %v690
        %v692 = vsel %vm691, %v689, %v690
        %vm693 = vcmp.eq.s32.totalorder %v139, %v648
        %vm694 = vcmp.eq.s32.totalorder %v140, %v648
        %vm695 = vcmp.eq.s32.totalorder %v139, %v692
        %vm696 = vcmp.eq.s32.totalorder %v140, %v692
        %v697 = vsel %vm693, 1, 0
        %v698 = vsel %vm694, 1, 0
        %vm699 = vcmp.eq.s32.totalorder %v697, 1
        %vm700 = vcmp.eq.s32.totalorder %v698, 1
        %v701 = vsel %vm699, %v469, 0.0
        %v702 = vsel %vm700, %v470, 0.0
        %v703 = vsel %vm143, %v701, 0.0
        %v704 = vsel %vm145, %v702, 0.0
        %v705 = vadd.f32 %v703, %v704
        %v706 = vrot.slane %v705, 4
        %v707 = vadd.f32 %v705, %v706
        %v708 = vrot.slane %v707, 2
        %v709 = vadd.f32 %v707, %v708
        %v710 = vrot.slane %v709, 1
        %v711 = vadd.f32 %v709, %v710
        %v712 = vsel %vm695, 1, 0
        %v713 = vsel %vm696, 1, 0
        %vm714 = vcmp.eq.s32.totalorder %v712, 1
        %vm715 = vcmp.eq.s32.totalorder %v713, 1
        %v716 = vsel %vm714, %v469, 0.0
        %v717 = vsel %vm715, %v470, 0.0
        %v718 = vsel %vm143, %v716, 0.0
        %v719 = vsel %vm145, %v717, 0.0
        %v720 = vadd.f32 %v718, %v719
        %v721 = vrot.slane %v720, 4
        %v722 = vadd.f32 %v720, %v721
        %v723 = vrot.slane %v722, 2
        %v724 = vadd.f32 %v722, %v723
        %v725 = vrot.slane %v724, 1
        %v726 = vadd.f32 %v724, %v725
        %v727 = vmul.f32 %v711, %v162
        %v728 = vmul.f32 %v726, %v162
        %v730 = vrot.slane %v728, 1
        %v732 = vadd.f32 %v727, %v730
        %v733 = vadd.f32 %v732, %v437
        %vm734 = vcmp.eq.s32.totalorder %v139, 7
        %vm735 = vcmp.eq.s32.totalorder %v140, 7
        %v736 = vsel %vm734, 1, 0
        %v737 = vsel %vm735, 1, 0
        %vm738 = vcmp.eq.s32.totalorder %v736, 1
        %vm739 = vcmp.eq.s32.totalorder %v737, 1
        %v740 = vperm.slane %v733, 0
        %v741 = vsel %vm738, %v740, %v469
        %v742 = vsel %vm739, %v740, %v470
        %743 = vst.msk [vmem:[#allocation2] sm:$0xff] %vm143, %v741
        %744 = vst.msk [vmem:[#allocation2 + $0x8] sm:$0x7] %vm145, %v742
        %vm745 = vmor %vm693, %vm695
        %vm746 = vmor %vm694, %vm696
        %v747 = vld [vmem:[#allocation3] sm:$0xff]
        %v748 = vld [vmem:[#allocation3 + $0x8] sm:$0x7]
        %v749 = vsel %vm734, 0.0, %v747
        %v750 = vsel %vm735, 0.0, %v748
        %v751 = vsel %vm745, inf, %v749
        %v752 = vsel %vm746, inf, %v750
        %753 = vst.msk [vmem:[#allocation3] sm:$0xff] %vm154, %v751
        %754 = vst.msk [vmem:[#allocation3 + $0x8] sm:$0x7] %vm156, %v752
        %vm755 = vcmp.eq.s32.totalorder %v142, %v648
        %vm756 = vcmp.eq.s32.totalorder %v142, %v692
        %vm757 = vmor %vm755, %vm756
        %vm758 = vcmp.eq.s32.totalorder %v142, 7
        %v759 = vld [vmem:[#allocation4] sm:$0x1]
        %v760 = vsel %vm758, 0.0, %v759
        %v761 = vsel %vm757, inf, %v760
        %762 = vst.msk [vmem:[#allocation4] sm:$0x1] %vm160, %v761
        %v763 = vld [vmem:[#allocation2] sm:$0xff]
        %v764 = vld [vmem:[#allocation2 + $0x8] sm:$0x7]
        %v766 = vsel %vm143, %v763, 0
        %v769 = vsel %vm143, %v764, 0
        %771 = vmatpush.xpose.msra.mxu0 0.0
        %772 = vmatpush.xpose.msra.mxu0 0.0
        %773 = vmatpush.xpose.msra.mxu0 0.0
        %774 = vmatpush.xpose.msra.mxu0 0.0
        %775 = vmatpush.xpose.msra.mxu0 0.0
        %776 = vmatpush.xpose.msra.mxu0 0.0
        %777 = vmatpush.xpose.msra.mxu0 0.0
        %778 = vmatpush.xpose.msra.mxu0 0.0
        %779 = vmatpush.xpose.msra.mxu0 0.0
        %780 = vmatpush.xpose.msra.mxu0 0.0
        %781 = vmatpush.xpose.msra.mxu0 0.0
        %782 = vmatpush.xpose.msra.mxu0 0.0
        %783 = vmatpush.xpose.msra.mxu0 0.0
        %784 = vmatpush.xpose.msra.mxu0 0.0
        %785 = vmatpush.xpose.msra.mxu0 %v769
        %786 = vmatpush.xpose.msra.mxu0 %v766
        %787 = vmatmul.f32.gmra.mxu0 %v766
        %v788 = vpop.f32.mrf.mxu0
        %v789 = vadd.f32 0.0, %v788
        %790 = vmatmul.f32.gmra.mxu0 %v769
        %v791 = vpop.f32.mrf.mxu0
        %v792 = vadd.f32 0.0, %v791
        %793 = vdwg.mxu0
        %v794 = vsel %vm194, %v789, 0.0
        %v795 = vsel %vm195, %v792, 0.0
        %v796 = vsel %vm198, %v794, 0.0
        %797 = vadd.xlane.f32.xlu0 %v796
        %v798 = vpop.xlane.xlu0 %797
        %v799 = vsel %vm202, %v795, 0.0
        %800 = vadd.xlane.f32.xlu0 %v799
        %v801 = vpop.xlane.xlu0 %800
        %v802 = vadd.f32 %v796, %v799
        %v803 = vrot.slane %v802, 4
        %v804 = vadd.f32 %v802, %v803
        %v805 = vrot.slane %v804, 2
        %v806 = vadd.f32 %v804, %v805
        %v807 = vrot.slane %v806, 1
        %v808 = vadd.f32 %v806, %v807
        %v809 = vadd.f32 %v798, %v808
        %v810 = vadd.f32 %v801, %v808
        %v811 = vmul.f32 %v789, 2.0
        %v812 = vmul.f32 %v792, 2.0
        %v813 = vsub.f32 %v809, %v811
        %v814 = vsub.f32 %v810, %v812
        %v815 = vsel %vm194, inf, %v813
        %v816 = vsel %vm195, inf, %v814
        %v817 = vld [vmem:[#allocation3] sm:$0xff]
        %v818 = vld [vmem:[#allocation3 + $0x8] sm:$0x7]
        %820 = vset.pattern.permute.xlu0 0
        %821 = vperm.xlu0 %820, %v817
        %v822 = vpop.permute.xlu0 %821
        %825 = vset.pattern.permute.xlu0 0
        %826 = vperm.xlu0 %825, %v818
        %v827 = vpop.permute.xlu0 %826
        %v829 = vadd.f32 %v815, %v822
        %v830 = vadd.f32 %v816, %v827
        %v831 = vld [vmem:[#allocation4] sm:$0x1]
        %v833 = vperm.slane %v831, 0
        %v835 = vadd.f32 %v829, %v833
        %v836 = vadd.f32 %v830, %v833
        %v837 = vsel %vm198, %v835, inf
        %838 = vmin.xlane.f32.xlu0 %v837
        %v839 = vpop.xlane.xlu0 %838
        %v840 = vsel %vm202, %v836, inf
        %841 = vmin.xlane.f32.xlu0 %v840
        %v842 = vpop.xlane.xlu0 %841
        %v843 = vsel %vm247, %v842, inf
        %v844 = vmin.f32 %v839, %v843
        %v845 = vrot.slane %v844, 4
        %v846 = vmin.f32 %v844, %v845
        %v847 = vrot.slane %v846, 2
        %v848 = vmin.f32 %v846, %v847
        %v849 = vrot.slane %v848, 1
        %v850 = vmin.f32 %v848, %v849
        %vm851 = vcmp.eq.f32.partialorder %v835, %v850
        %vm852 = vcmp.eq.f32.partialorder %v836, %v850
        %v853 = vsel %vm851, %v258, 121
        %v854 = vsel %vm852, %v259, 121
        %v855 = vsel %vm198, %v853, 2147483647
        %v856 = vand.u32 %v855, 65535
        %v857 = vshra.s32 %v855, 16
        %v858 = vcvt.s32.f32 %v856
        %v859 = vcvt.s32.f32 %v857
        %860 = vmin.xlane.f32.xlu0 %v859
        %v861 = vpop.xlane.xlu0 %860
        %vm862 = vcmp.eq.f32.partialorder %v859, %v861
        %v863 = vsel %vm862, %v858, inf
        %864 = vmin.xlane.f32.xlu0 %v863
        %v865 = vpop.xlane.xlu0 %864
        %v866 = vcvt.f32.s32 %v865
        %v867 = vcvt.f32.s32 %v861
        %v868 = vshll.u32 %v867, 16
        %v869 = vadd.s32 %v868, %v866
        %v870 = vsel %vm202, %v854, 2147483647
        %v871 = vand.u32 %v870, 65535
        %v872 = vshra.s32 %v870, 16
        %v873 = vcvt.s32.f32 %v871
        %v874 = vcvt.s32.f32 %v872
        %875 = vmin.xlane.f32.xlu0 %v874
        %v876 = vpop.xlane.xlu0 %875
        %vm877 = vcmp.eq.f32.partialorder %v874, %v876
        %v878 = vsel %vm877, %v873, inf
        %879 = vmin.xlane.f32.xlu0 %v878
        %v880 = vpop.xlane.xlu0 %879
        %v881 = vcvt.f32.s32 %v880
        %v882 = vcvt.f32.s32 %v876
        %v883 = vshll.u32 %v882, 16
        %v884 = vadd.s32 %v883, %v881
        %v885 = vsel %vm247, %v884, 2147483647
        %vm886 = vcmp.lt.s32.totalorder %v869, %v885
        %v887 = vsel %vm886, %v869, %v885
        %v888 = vrot.slane %v887, 4
        %vm889 = vcmp.lt.s32.totalorder %v887, %v888
        %v890 = vsel %vm889, %v887, %v888
        %v891 = vrot.slane %v890, 2
        %vm892 = vcmp.lt.s32.totalorder %v890, %v891
        %v893 = vsel %vm892, %v890, %v891
        %v894 = vrot.slane %v893, 1
        %vm895 = vcmp.lt.s32.totalorder %v893, %v894
        %v896 = vsel %vm895, %v893, %v894
        %vm897 = vcmp.eq.s32.totalorder %v853, %v896
        %vm898 = vcmp.eq.s32.totalorder %v854, %v896
        %v899 = vsel %vm897, %v139, 11
        %v900 = vsel %vm898, %v140, 11
        %v901 = vsel %vm198, %v899, 2147483647
        %v902 = vand.u32 %v901, 65535
        %v903 = vshra.s32 %v901, 16
        %v904 = vcvt.s32.f32 %v902
        %v905 = vcvt.s32.f32 %v903
        %906 = vmin.xlane.f32.xlu0 %v905
        %v907 = vpop.xlane.xlu0 %906
        %vm908 = vcmp.eq.f32.partialorder %v905, %v907
        %v909 = vsel %vm908, %v904, inf
        %910 = vmin.xlane.f32.xlu0 %v909
        %v911 = vpop.xlane.xlu0 %910
        %v912 = vcvt.f32.s32 %v911
        %v913 = vcvt.f32.s32 %v907
        %v914 = vshll.u32 %v913, 16
        %v915 = vadd.s32 %v914, %v912
        %v916 = vsel %vm202, %v900, 2147483647
        %v917 = vand.u32 %v916, 65535
        %v918 = vshra.s32 %v916, 16
        %v919 = vcvt.s32.f32 %v917
        %v920 = vcvt.s32.f32 %v918
        %921 = vmin.xlane.f32.xlu0 %v920
        %v922 = vpop.xlane.xlu0 %921
        %vm923 = vcmp.eq.f32.partialorder %v920, %v922
        %v924 = vsel %vm923, %v919, inf
        %925 = vmin.xlane.f32.xlu0 %v924
        %v926 = vpop.xlane.xlu0 %925
        %v927 = vcvt.f32.s32 %v926
        %v928 = vcvt.f32.s32 %v922
        %v929 = vshll.u32 %v928, 16
        %v930 = vadd.s32 %v929, %v927
        %v931 = vsel %vm247, %v930, 2147483647
        %vm932 = vcmp.lt.s32.totalorder %v915, %v931
        %v933 = vsel %vm932, %v915, %v931
        %v934 = vrot.slane %v933, 4
        %vm935 = vcmp.lt.s32.totalorder %v933, %v934
        %v936 = vsel %vm935, %v933, %v934
        %v937 = vrot.slane %v936, 2
        %vm938 = vcmp.lt.s32.totalorder %v936, %v937
        %v939 = vsel %vm938, %v936, %v937
        %v940 = vrot.slane %v939, 1
        %vm941 = vcmp.lt.s32.totalorder %v939, %v940
        %v942 = vsel %vm941, %v939, %v940
        %v943 = vsel %vm897, %v142, 11
        %v944 = vsel %vm898, %v142, 11
        %v945 = vsel %vm198, %v943, 2147483647
        %v946 = vand.u32 %v945, 65535
        %v947 = vshra.s32 %v945, 16
        %v948 = vcvt.s32.f32 %v946
        %v949 = vcvt.s32.f32 %v947
        %950 = vmin.xlane.f32.xlu0 %v949
        %v951 = vpop.xlane.xlu0 %950
        %vm952 = vcmp.eq.f32.partialorder %v949, %v951
        %v953 = vsel %vm952, %v948, inf
        %954 = vmin.xlane.f32.xlu0 %v953
        %v955 = vpop.xlane.xlu0 %954
        %v956 = vcvt.f32.s32 %v955
        %v957 = vcvt.f32.s32 %v951
        %v958 = vshll.u32 %v957, 16
        %v959 = vadd.s32 %v958, %v956
        %v960 = vsel %vm202, %v944, 2147483647
        %v961 = vand.u32 %v960, 65535
        %v962 = vshra.s32 %v960, 16
        %v963 = vcvt.s32.f32 %v961
        %v964 = vcvt.s32.f32 %v962
        %965 = vmin.xlane.f32.xlu0 %v964
        %v966 = vpop.xlane.xlu0 %965
        %vm967 = vcmp.eq.f32.partialorder %v964, %v966
        %v968 = vsel %vm967, %v963, inf
        %969 = vmin.xlane.f32.xlu0 %v968
        %v970 = vpop.xlane.xlu0 %969
        %v971 = vcvt.f32.s32 %v970
        %v972 = vcvt.f32.s32 %v966
        %v973 = vshll.u32 %v972, 16
        %v974 = vadd.s32 %v973, %v971
        %v975 = vsel %vm247, %v974, 2147483647
        %vm976 = vcmp.lt.s32.totalorder %v959, %v975
        %v977 = vsel %vm976, %v959, %v975
        %v978 = vrot.slane %v977, 4
        %vm979 = vcmp.lt.s32.totalorder %v977, %v978
        %v980 = vsel %vm979, %v977, %v978
        %v981 = vrot.slane %v980, 2
        %vm982 = vcmp.lt.s32.totalorder %v980, %v981
        %v983 = vsel %vm982, %v980, %v981
        %v984 = vrot.slane %v983, 1
        %vm985 = vcmp.lt.s32.totalorder %v983, %v984
        %v986 = vsel %vm985, %v983, %v984
        %vm987 = vcmp.eq.s32.totalorder %v139, %v942
        %vm988 = vcmp.eq.s32.totalorder %v140, %v942
        %vm989 = vcmp.eq.s32.totalorder %v139, %v986
        %vm990 = vcmp.eq.s32.totalorder %v140, %v986
        %v991 = vsel %vm987, 1, 0
        %v992 = vsel %vm988, 1, 0
        %vm993 = vcmp.eq.s32.totalorder %v991, 1
        %vm994 = vcmp.eq.s32.totalorder %v992, 1
        %v995 = vsel %vm993, %v763, 0.0
        %v996 = vsel %vm994, %v764, 0.0
        %v997 = vsel %vm143, %v995, 0.0
        %v998 = vsel %vm145, %v996, 0.0
        %v999 = vadd.f32 %v997, %v998
        %v1000 = vrot.slane %v999, 4
        %v1001 = vadd.f32 %v999, %v1000
        %v1002 = vrot.slane %v1001, 2
        %v1003 = vadd.f32 %v1001, %v1002
        %v1004 = vrot.slane %v1003, 1
        %v1005 = vadd.f32 %v1003, %v1004
        %v1006 = vsel %vm989, 1, 0
        %v1007 = vsel %vm990, 1, 0
        %vm1008 = vcmp.eq.s32.totalorder %v1006, 1
        %vm1009 = vcmp.eq.s32.totalorder %v1007, 1
        %v1010 = vsel %vm1008, %v763, 0.0
        %v1011 = vsel %vm1009, %v764, 0.0
        %v1012 = vsel %vm143, %v1010, 0.0
        %v1013 = vsel %vm145, %v1011, 0.0
        %v1014 = vadd.f32 %v1012, %v1013
        %v1015 = vrot.slane %v1014, 4
        %v1016 = vadd.f32 %v1014, %v1015
        %v1017 = vrot.slane %v1016, 2
        %v1018 = vadd.f32 %v1016, %v1017
        %v1019 = vrot.slane %v1018, 1
        %v1020 = vadd.f32 %v1018, %v1019
        %v1021 = vmul.f32 %v1005, %v162
        %v1022 = vmul.f32 %v1020, %v162
        %v1024 = vrot.slane %v1022, 1
        %v1026 = vadd.f32 %v1021, %v1024
        %v1027 = vadd.f32 %v1026, %v437
        %vm1028 = vcmp.eq.s32.totalorder %v139, 8
        %vm1029 = vcmp.eq.s32.totalorder %v140, 8
        %v1030 = vsel %vm1028, 1, 0
        %v1031 = vsel %vm1029, 1, 0
        %vm1032 = vcmp.eq.s32.totalorder %v1030, 1
        %vm1033 = vcmp.eq.s32.totalorder %v1031, 1
        %v1034 = vperm.slane %v1027, 0
        %v1035 = vsel %vm1032, %v1034, %v763
        %v1036 = vsel %vm1033, %v1034, %v764
        %1037 = vst.msk [vmem:[#allocation2] sm:$0xff] %vm143, %v1035
        %1038 = vst.msk [vmem:[#allocation2 + $0x8] sm:$0x7] %vm145, %v1036
        %vm1039 = vmor %vm987, %vm989
        %vm1040 = vmor %vm988, %vm990
        %v1041 = vld [vmem:[#allocation3] sm:$0xff]
        %v1042 = vld [vmem:[#allocation3 + $0x8] sm:$0x7]
        %v1043 = vsel %vm1028, 0.0, %v1041
        %v1044 = vsel %vm1029, 0.0, %v1042
        %v1045 = vsel %vm1039, inf, %v1043
        %v1046 = vsel %vm1040, inf, %v1044
        %1047 = vst.msk [vmem:[#allocation3] sm:$0xff] %vm154, %v1045
        %1048 = vst.msk [vmem:[#allocation3 + $0x8] sm:$0x7] %vm156, %v1046
        %vm1049 = vcmp.eq.s32.totalorder %v142, %v942
        %vm1050 = vcmp.eq.s32.totalorder %v142, %v986
        %vm1051 = vmor %vm1049, %vm1050
        %vm1052 = vcmp.eq.s32.totalorder %v142, 8
        %v1053 = vld [vmem:[#allocation4] sm:$0x1]
        %v1054 = vsel %vm1052, 0.0, %v1053
        %v1055 = vsel %vm1051, inf, %v1054
        %1056 = vst.msk [vmem:[#allocation4] sm:$0x1] %vm160, %v1055
        %v1057 = vld [vmem:[#allocation2] sm:$0xff]
        %v1058 = vld [vmem:[#allocation2 + $0x8] sm:$0x7]
        %v1060 = vsel %vm143, %v1057, 0
        %v1063 = vsel %vm143, %v1058, 0
        %1065 = vmatpush.xpose.msra.mxu0 0.0
        %1066 = vmatpush.xpose.msra.mxu0 0.0
        %1067 = vmatpush.xpose.msra.mxu0 0.0
        %1068 = vmatpush.xpose.msra.mxu0 0.0
        %1069 = vmatpush.xpose.msra.mxu0 0.0
        %1070 = vmatpush.xpose.msra.mxu0 0.0
        %1071 = vmatpush.xpose.msra.mxu0 0.0
        %1072 = vmatpush.xpose.msra.mxu0 0.0
        %1073 = vmatpush.xpose.msra.mxu0 0.0
        %1074 = vmatpush.xpose.msra.mxu0 0.0
        %1075 = vmatpush.xpose.msra.mxu0 0.0
        %1076 = vmatpush.xpose.msra.mxu0 0.0
        %1077 = vmatpush.xpose.msra.mxu0 0.0
        %1078 = vmatpush.xpose.msra.mxu0 0.0
        %1079 = vmatpush.xpose.msra.mxu0 %v1063
        %1080 = vmatpush.xpose.msra.mxu0 %v1060
        %1081 = vmatmul.f32.gmra.mxu0 %v1060
        %v1082 = vpop.f32.mrf.mxu0
        %v1083 = vadd.f32 0.0, %v1082
        %1084 = vmatmul.f32.gmra.mxu0 %v1063
        %v1085 = vpop.f32.mrf.mxu0
        %v1086 = vadd.f32 0.0, %v1085
        %1087 = vdwg.mxu0
        %v1088 = vsel %vm194, %v1083, 0.0
        %v1089 = vsel %vm195, %v1086, 0.0
        %v1090 = vsel %vm198, %v1088, 0.0
        %1091 = vadd.xlane.f32.xlu0 %v1090
        %v1092 = vpop.xlane.xlu0 %1091
        %v1093 = vsel %vm202, %v1089, 0.0
        %1094 = vadd.xlane.f32.xlu0 %v1093
        %v1095 = vpop.xlane.xlu0 %1094
        %v1096 = vadd.f32 %v1090, %v1093
        %v1097 = vrot.slane %v1096, 4
        %v1098 = vadd.f32 %v1096, %v1097
        %v1099 = vrot.slane %v1098, 2
        %v1100 = vadd.f32 %v1098, %v1099
        %v1101 = vrot.slane %v1100, 1
        %v1102 = vadd.f32 %v1100, %v1101
        %v1103 = vadd.f32 %v1092, %v1102
        %v1104 = vadd.f32 %v1095, %v1102
        %v1105 = vmul.f32 %v1083, 2.0
        %v1106 = vmul.f32 %v1086, 2.0
        %v1107 = vsub.f32 %v1103, %v1105
        %v1108 = vsub.f32 %v1104, %v1106
        %v1109 = vsel %vm194, inf, %v1107
        %v1110 = vsel %vm195, inf, %v1108
        %v1111 = vld [vmem:[#allocation3] sm:$0xff]
        %v1112 = vld [vmem:[#allocation3 + $0x8] sm:$0x7]
        %1114 = vset.pattern.permute.xlu0 0
        %1115 = vperm.xlu0 %1114, %v1111
        %v1116 = vpop.permute.xlu0 %1115
        %1119 = vset.pattern.permute.xlu0 0
        %1120 = vperm.xlu0 %1119, %v1112
        %v1121 = vpop.permute.xlu0 %1120
        %v1123 = vadd.f32 %v1109, %v1116
        %v1124 = vadd.f32 %v1110, %v1121
        %v1125 = vld [vmem:[#allocation4] sm:$0x1]
        %v1127 = vperm.slane %v1125, 0
        %v1129 = vadd.f32 %v1123, %v1127
        %v1130 = vadd.f32 %v1124, %v1127
        %v1131 = vsel %vm198, %v1129, inf
        %1132 = vmin.xlane.f32.xlu0 %v1131
        %v1133 = vpop.xlane.xlu0 %1132
        %v1134 = vsel %vm202, %v1130, inf
        %1135 = vmin.xlane.f32.xlu0 %v1134
        %v1136 = vpop.xlane.xlu0 %1135
        %v1137 = vsel %vm247, %v1136, inf
        %v1138 = vmin.f32 %v1133, %v1137
        %v1139 = vrot.slane %v1138, 4
        %v1140 = vmin.f32 %v1138, %v1139
        %v1141 = vrot.slane %v1140, 2
        %v1142 = vmin.f32 %v1140, %v1141
        %v1143 = vrot.slane %v1142, 1
        %v1144 = vmin.f32 %v1142, %v1143
        %vm1145 = vcmp.eq.f32.partialorder %v1129, %v1144
        %vm1146 = vcmp.eq.f32.partialorder %v1130, %v1144
        %v1147 = vsel %vm1145, %v258, 121
        %v1148 = vsel %vm1146, %v259, 121
        %v1149 = vsel %vm198, %v1147, 2147483647
        %v1150 = vand.u32 %v1149, 65535
        %v1151 = vshra.s32 %v1149, 16
        %v1152 = vcvt.s32.f32 %v1150
        %v1153 = vcvt.s32.f32 %v1151
        %1154 = vmin.xlane.f32.xlu0 %v1153
        %v1155 = vpop.xlane.xlu0 %1154
        %vm1156 = vcmp.eq.f32.partialorder %v1153, %v1155
        %v1157 = vsel %vm1156, %v1152, inf
        %1158 = vmin.xlane.f32.xlu0 %v1157
        %v1159 = vpop.xlane.xlu0 %1158
        %v1160 = vcvt.f32.s32 %v1159
        %v1161 = vcvt.f32.s32 %v1155
        %v1162 = vshll.u32 %v1161, 16
        %v1163 = vadd.s32 %v1162, %v1160
        %v1164 = vsel %vm202, %v1148, 2147483647
        %v1165 = vand.u32 %v1164, 65535
        %v1166 = vshra.s32 %v1164, 16
        %v1167 = vcvt.s32.f32 %v1165
        %v1168 = vcvt.s32.f32 %v1166
        %1169 = vmin.xlane.f32.xlu0 %v1168
        %v1170 = vpop.xlane.xlu0 %1169
        %vm1171 = vcmp.eq.f32.partialorder %v1168, %v1170
        %v1172 = vsel %vm1171, %v1167, inf
        %1173 = vmin.xlane.f32.xlu0 %v1172
        %v1174 = vpop.xlane.xlu0 %1173
        %v1175 = vcvt.f32.s32 %v1174
        %v1176 = vcvt.f32.s32 %v1170
        %v1177 = vshll.u32 %v1176, 16
        %v1178 = vadd.s32 %v1177, %v1175
        %v1179 = vsel %vm247, %v1178, 2147483647
        %vm1180 = vcmp.lt.s32.totalorder %v1163, %v1179
        %v1181 = vsel %vm1180, %v1163, %v1179
        %v1182 = vrot.slane %v1181, 4
        %vm1183 = vcmp.lt.s32.totalorder %v1181, %v1182
        %v1184 = vsel %vm1183, %v1181, %v1182
        %v1185 = vrot.slane %v1184, 2
        %vm1186 = vcmp.lt.s32.totalorder %v1184, %v1185
        %v1187 = vsel %vm1186, %v1184, %v1185
        %v1188 = vrot.slane %v1187, 1
        %vm1189 = vcmp.lt.s32.totalorder %v1187, %v1188
        %v1190 = vsel %vm1189, %v1187, %v1188
        %vm1191 = vcmp.eq.s32.totalorder %v1147, %v1190
        %vm1192 = vcmp.eq.s32.totalorder %v1148, %v1190
        %v1193 = vsel %vm1191, %v139, 11
        %v1194 = vsel %vm1192, %v140, 11
        %v1195 = vsel %vm198, %v1193, 2147483647
        %v1196 = vand.u32 %v1195, 65535
        %v1197 = vshra.s32 %v1195, 16
        %v1198 = vcvt.s32.f32 %v1196
        %v1199 = vcvt.s32.f32 %v1197
        %1200 = vmin.xlane.f32.xlu0 %v1199
        %v1201 = vpop.xlane.xlu0 %1200
        %vm1202 = vcmp.eq.f32.partialorder %v1199, %v1201
        %v1203 = vsel %vm1202, %v1198, inf
        %1204 = vmin.xlane.f32.xlu0 %v1203
        %v1205 = vpop.xlane.xlu0 %1204
        %v1206 = vcvt.f32.s32 %v1205
        %v1207 = vcvt.f32.s32 %v1201
        %v1208 = vshll.u32 %v1207, 16
        %v1209 = vadd.s32 %v1208, %v1206
        %v1210 = vsel %vm202, %v1194, 2147483647
        %v1211 = vand.u32 %v1210, 65535
        %v1212 = vshra.s32 %v1210, 16
        %v1213 = vcvt.s32.f32 %v1211
        %v1214 = vcvt.s32.f32 %v1212
        %1215 = vmin.xlane.f32.xlu0 %v1214
        %v1216 = vpop.xlane.xlu0 %1215
        %vm1217 = vcmp.eq.f32.partialorder %v1214, %v1216
        %v1218 = vsel %vm1217, %v1213, inf
        %1219 = vmin.xlane.f32.xlu0 %v1218
        %v1220 = vpop.xlane.xlu0 %1219
        %v1221 = vcvt.f32.s32 %v1220
        %v1222 = vcvt.f32.s32 %v1216
        %v1223 = vshll.u32 %v1222, 16
        %v1224 = vadd.s32 %v1223, %v1221
        %v1225 = vsel %vm247, %v1224, 2147483647
        %vm1226 = vcmp.lt.s32.totalorder %v1209, %v1225
        %v1227 = vsel %vm1226, %v1209, %v1225
        %v1228 = vrot.slane %v1227, 4
        %vm1229 = vcmp.lt.s32.totalorder %v1227, %v1228
        %v1230 = vsel %vm1229, %v1227, %v1228
        %v1231 = vrot.slane %v1230, 2
        %vm1232 = vcmp.lt.s32.totalorder %v1230, %v1231
        %v1233 = vsel %vm1232, %v1230, %v1231
        %v1234 = vrot.slane %v1233, 1
        %vm1235 = vcmp.lt.s32.totalorder %v1233, %v1234
        %v1236 = vsel %vm1235, %v1233, %v1234
        %v1237 = vsel %vm1191, %v142, 11
        %v1238 = vsel %vm1192, %v142, 11
        %v1239 = vsel %vm198, %v1237, 2147483647
        %v1240 = vand.u32 %v1239, 65535
        %v1241 = vshra.s32 %v1239, 16
        %v1242 = vcvt.s32.f32 %v1240
        %v1243 = vcvt.s32.f32 %v1241
        %1244 = vmin.xlane.f32.xlu0 %v1243
        %v1245 = vpop.xlane.xlu0 %1244
        %vm1246 = vcmp.eq.f32.partialorder %v1243, %v1245
        %v1247 = vsel %vm1246, %v1242, inf
        %1248 = vmin.xlane.f32.xlu0 %v1247
        %v1249 = vpop.xlane.xlu0 %1248
        %v1250 = vcvt.f32.s32 %v1249
        %v1251 = vcvt.f32.s32 %v1245
        %v1252 = vshll.u32 %v1251, 16
        %v1253 = vadd.s32 %v1252, %v1250
        %v1254 = vsel %vm202, %v1238, 2147483647
        %v1255 = vand.u32 %v1254, 65535
        %v1256 = vshra.s32 %v1254, 16
        %v1257 = vcvt.s32.f32 %v1255
        %v1258 = vcvt.s32.f32 %v1256
        %1259 = vmin.xlane.f32.xlu0 %v1258
        %v1260 = vpop.xlane.xlu0 %1259
        %vm1261 = vcmp.eq.f32.partialorder %v1258, %v1260
        %v1262 = vsel %vm1261, %v1257, inf
        %1263 = vmin.xlane.f32.xlu0 %v1262
        %v1264 = vpop.xlane.xlu0 %1263
        %v1265 = vcvt.f32.s32 %v1264
        %v1266 = vcvt.f32.s32 %v1260
        %v1267 = vshll.u32 %v1266, 16
        %v1268 = vadd.s32 %v1267, %v1265
        %v1269 = vsel %vm247, %v1268, 2147483647
        %vm1270 = vcmp.lt.s32.totalorder %v1253, %v1269
        %v1271 = vsel %vm1270, %v1253, %v1269
        %v1272 = vrot.slane %v1271, 4
        %vm1273 = vcmp.lt.s32.totalorder %v1271, %v1272
        %v1274 = vsel %vm1273, %v1271, %v1272
        %v1275 = vrot.slane %v1274, 2
        %vm1276 = vcmp.lt.s32.totalorder %v1274, %v1275
        %v1277 = vsel %vm1276, %v1274, %v1275
        %v1278 = vrot.slane %v1277, 1
        %vm1279 = vcmp.lt.s32.totalorder %v1277, %v1278
        %v1280 = vsel %vm1279, %v1277, %v1278
        %vm1281 = vcmp.eq.s32.totalorder %v139, %v1236
        %vm1282 = vcmp.eq.s32.totalorder %v140, %v1236
        %vm1283 = vcmp.eq.s32.totalorder %v139, %v1280
        %vm1284 = vcmp.eq.s32.totalorder %v140, %v1280
        %v1285 = vsel %vm1281, 1, 0
        %v1286 = vsel %vm1282, 1, 0
        %vm1287 = vcmp.eq.s32.totalorder %v1285, 1
        %vm1288 = vcmp.eq.s32.totalorder %v1286, 1
        %v1289 = vsel %vm1287, %v1057, 0.0
        %v1290 = vsel %vm1288, %v1058, 0.0
        %v1291 = vsel %vm143, %v1289, 0.0
        %v1292 = vsel %vm145, %v1290, 0.0
        %v1293 = vadd.f32 %v1291, %v1292
        %v1294 = vrot.slane %v1293, 4
        %v1295 = vadd.f32 %v1293, %v1294
        %v1296 = vrot.slane %v1295, 2
        %v1297 = vadd.f32 %v1295, %v1296
        %v1298 = vrot.slane %v1297, 1
        %v1299 = vadd.f32 %v1297, %v1298
        %v1300 = vsel %vm1283, 1, 0
        %v1301 = vsel %vm1284, 1, 0
        %vm1302 = vcmp.eq.s32.totalorder %v1300, 1
        %vm1303 = vcmp.eq.s32.totalorder %v1301, 1
        %v1304 = vsel %vm1302, %v1057, 0.0
        %v1305 = vsel %vm1303, %v1058, 0.0
        %v1306 = vsel %vm143, %v1304, 0.0
        %v1307 = vsel %vm145, %v1305, 0.0
        %v1308 = vadd.f32 %v1306, %v1307
        %v1309 = vrot.slane %v1308, 4
        %v1310 = vadd.f32 %v1308, %v1309
        %v1311 = vrot.slane %v1310, 2
        %v1312 = vadd.f32 %v1310, %v1311
        %v1313 = vrot.slane %v1312, 1
        %v1314 = vadd.f32 %v1312, %v1313
        %v1315 = vmul.f32 %v1299, %v162
        %v1316 = vmul.f32 %v1314, %v162
        %v1318 = vrot.slane %v1316, 1
        %v1320 = vadd.f32 %v1315, %v1318
        %v1321 = vadd.f32 %v1320, %v437
        %vm1322 = vcmp.eq.s32.totalorder %v139, 9
        %vm1323 = vcmp.eq.s32.totalorder %v140, 9
        %v1324 = vsel %vm1322, 1, 0
        %v1325 = vsel %vm1323, 1, 0
        %vm1326 = vcmp.eq.s32.totalorder %v1324, 1
        %vm1327 = vcmp.eq.s32.totalorder %v1325, 1
        %v1328 = vperm.slane %v1321, 0
        %v1329 = vsel %vm1326, %v1328, %v1057
        %v1330 = vsel %vm1327, %v1328, %v1058
        %1331 = vst.msk [vmem:[#allocation2] sm:$0xff] %vm143, %v1329
        %1332 = vst.msk [vmem:[#allocation2 + $0x8] sm:$0x7] %vm145, %v1330
        %vm1333 = vmor %vm1281, %vm1283
        %vm1334 = vmor %vm1282, %vm1284
        %v1335 = vld [vmem:[#allocation3] sm:$0xff]
        %v1336 = vld [vmem:[#allocation3 + $0x8] sm:$0x7]
        %v1337 = vsel %vm1322, 0.0, %v1335
        %v1338 = vsel %vm1323, 0.0, %v1336
        %v1339 = vsel %vm1333, inf, %v1337
        %v1340 = vsel %vm1334, inf, %v1338
        %1341 = vst.msk [vmem:[#allocation3] sm:$0xff] %vm154, %v1339
        %1342 = vst.msk [vmem:[#allocation3 + $0x8] sm:$0x7] %vm156, %v1340
        %vm1343 = vcmp.eq.s32.totalorder %v142, %v1236
        %vm1344 = vcmp.eq.s32.totalorder %v142, %v1280
        %vm1345 = vmor %vm1343, %vm1344
        %vm1346 = vcmp.eq.s32.totalorder %v142, 9
        %v1347 = vld [vmem:[#allocation4] sm:$0x1]
        %v1348 = vsel %vm1346, 0.0, %v1347
        %v1349 = vsel %vm1345, inf, %v1348
        %1350 = vst.msk [vmem:[#allocation4] sm:$0x1] %vm160, %v1349
        %v1351 = vld [vmem:[#allocation2] sm:$0xff]
        %v1352 = vld [vmem:[#allocation2 + $0x8] sm:$0x7]
        %v1354 = vsel %vm143, %v1351, 0
        %v1357 = vsel %vm143, %v1352, 0
        %1359 = vmatpush.xpose.msra.mxu0 0.0
        %1360 = vmatpush.xpose.msra.mxu0 0.0
        %1361 = vmatpush.xpose.msra.mxu0 0.0
        %1362 = vmatpush.xpose.msra.mxu0 0.0
        %1363 = vmatpush.xpose.msra.mxu0 0.0
        %1364 = vmatpush.xpose.msra.mxu0 0.0
        %1365 = vmatpush.xpose.msra.mxu0 0.0
        %1366 = vmatpush.xpose.msra.mxu0 0.0
        %1367 = vmatpush.xpose.msra.mxu0 0.0
        %1368 = vmatpush.xpose.msra.mxu0 0.0
        %1369 = vmatpush.xpose.msra.mxu0 0.0
        %1370 = vmatpush.xpose.msra.mxu0 0.0
        %1371 = vmatpush.xpose.msra.mxu0 0.0
        %1372 = vmatpush.xpose.msra.mxu0 0.0
        %1373 = vmatpush.xpose.msra.mxu0 %v1357
        %1374 = vmatpush.xpose.msra.mxu0 %v1354
        %1375 = vmatmul.f32.gmra.mxu0 %v1354
        %v1376 = vpop.f32.mrf.mxu0
        %v1377 = vadd.f32 0.0, %v1376
        %1378 = vmatmul.f32.gmra.mxu0 %v1357
        %v1379 = vpop.f32.mrf.mxu0
        %v1380 = vadd.f32 0.0, %v1379
        %1381 = vdwg.mxu0
        %v1382 = vsel %vm194, %v1377, 0.0
        %v1383 = vsel %vm195, %v1380, 0.0
        %v1384 = vsel %vm198, %v1382, 0.0
        %1385 = vadd.xlane.f32.xlu0 %v1384
        %v1386 = vpop.xlane.xlu0 %1385
        %v1387 = vsel %vm202, %v1383, 0.0
        %1388 = vadd.xlane.f32.xlu0 %v1387
        %v1389 = vpop.xlane.xlu0 %1388
        %v1390 = vadd.f32 %v1384, %v1387
        %v1391 = vrot.slane %v1390, 4
        %v1392 = vadd.f32 %v1390, %v1391
        %v1393 = vrot.slane %v1392, 2
        %v1394 = vadd.f32 %v1392, %v1393
        %v1395 = vrot.slane %v1394, 1
        %v1396 = vadd.f32 %v1394, %v1395
        %v1397 = vadd.f32 %v1386, %v1396
        %v1398 = vadd.f32 %v1389, %v1396
        %v1399 = vmul.f32 %v1377, 2.0
        %v1400 = vmul.f32 %v1380, 2.0
        %v1401 = vsub.f32 %v1397, %v1399
        %v1402 = vsub.f32 %v1398, %v1400
        %v1403 = vsel %vm194, inf, %v1401
        %v1404 = vsel %vm195, inf, %v1402
        %v1405 = vld [vmem:[#allocation3] sm:$0xff]
        %v1406 = vld [vmem:[#allocation3 + $0x8] sm:$0x7]
        %1408 = vset.pattern.permute.xlu0 0
        %1409 = vperm.xlu0 %1408, %v1405
        %v1410 = vpop.permute.xlu0 %1409
        %1413 = vset.pattern.permute.xlu0 0
        %1414 = vperm.xlu0 %1413, %v1406
        %v1415 = vpop.permute.xlu0 %1414
        %v1417 = vadd.f32 %v1403, %v1410
        %v1418 = vadd.f32 %v1404, %v1415
        %v1419 = vld [vmem:[#allocation4] sm:$0x1]
        %v1421 = vperm.slane %v1419, 0
        %v1423 = vadd.f32 %v1417, %v1421
        %v1424 = vadd.f32 %v1418, %v1421
        %v1425 = vsel %vm198, %v1423, inf
        %1426 = vmin.xlane.f32.xlu0 %v1425
        %v1427 = vpop.xlane.xlu0 %1426
        %v1428 = vsel %vm202, %v1424, inf
        %1429 = vmin.xlane.f32.xlu0 %v1428
        %v1430 = vpop.xlane.xlu0 %1429
        %v1431 = vsel %vm247, %v1430, inf
        %v1432 = vmin.f32 %v1427, %v1431
        %v1433 = vrot.slane %v1432, 4
        %v1434 = vmin.f32 %v1432, %v1433
        %v1435 = vrot.slane %v1434, 2
        %v1436 = vmin.f32 %v1434, %v1435
        %v1437 = vrot.slane %v1436, 1
        %v1438 = vmin.f32 %v1436, %v1437
        %vm1439 = vcmp.eq.f32.partialorder %v1423, %v1438
        %vm1440 = vcmp.eq.f32.partialorder %v1424, %v1438
        %v1441 = vsel %vm1439, %v258, 121
        %v1442 = vsel %vm1440, %v259, 121
        %v1443 = vsel %vm198, %v1441, 2147483647
        %v1444 = vand.u32 %v1443, 65535
        %v1445 = vshra.s32 %v1443, 16
        %v1446 = vcvt.s32.f32 %v1444
        %v1447 = vcvt.s32.f32 %v1445
        %1448 = vmin.xlane.f32.xlu0 %v1447
        %v1449 = vpop.xlane.xlu0 %1448
        %vm1450 = vcmp.eq.f32.partialorder %v1447, %v1449
        %v1451 = vsel %vm1450, %v1446, inf
        %1452 = vmin.xlane.f32.xlu0 %v1451
        %v1453 = vpop.xlane.xlu0 %1452
        %v1454 = vcvt.f32.s32 %v1453
        %v1455 = vcvt.f32.s32 %v1449
        %v1456 = vshll.u32 %v1455, 16
        %v1457 = vadd.s32 %v1456, %v1454
        %v1458 = vsel %vm202, %v1442, 2147483647
        %v1459 = vand.u32 %v1458, 65535
        %v1460 = vshra.s32 %v1458, 16
        %v1461 = vcvt.s32.f32 %v1459
        %v1462 = vcvt.s32.f32 %v1460
        %1463 = vmin.xlane.f32.xlu0 %v1462
        %v1464 = vpop.xlane.xlu0 %1463
        %vm1465 = vcmp.eq.f32.partialorder %v1462, %v1464
        %v1466 = vsel %vm1465, %v1461, inf
        %1467 = vmin.xlane.f32.xlu0 %v1466
        %v1468 = vpop.xlane.xlu0 %1467
        %v1469 = vcvt.f32.s32 %v1468
        %v1470 = vcvt.f32.s32 %v1464
        %v1471 = vshll.u32 %v1470, 16
        %v1472 = vadd.s32 %v1471, %v1469
        %v1473 = vsel %vm247, %v1472, 2147483647
        %vm1474 = vcmp.lt.s32.totalorder %v1457, %v1473
        %v1475 = vsel %vm1474, %v1457, %v1473
        %v1476 = vrot.slane %v1475, 4
        %vm1477 = vcmp.lt.s32.totalorder %v1475, %v1476
        %v1478 = vsel %vm1477, %v1475, %v1476
        %v1479 = vrot.slane %v1478, 2
        %vm1480 = vcmp.lt.s32.totalorder %v1478, %v1479
        %v1481 = vsel %vm1480, %v1478, %v1479
        %v1482 = vrot.slane %v1481, 1
        %vm1483 = vcmp.lt.s32.totalorder %v1481, %v1482
        %v1484 = vsel %vm1483, %v1481, %v1482
        %vm1485 = vcmp.eq.s32.totalorder %v1441, %v1484
        %vm1486 = vcmp.eq.s32.totalorder %v1442, %v1484
        %v1487 = vsel %vm1485, %v139, 11
        %v1488 = vsel %vm1486, %v140, 11
        %v1489 = vsel %vm198, %v1487, 2147483647
        %v1490 = vand.u32 %v1489, 65535
        %v1491 = vshra.s32 %v1489, 16
        %v1492 = vcvt.s32.f32 %v1490
        %v1493 = vcvt.s32.f32 %v1491
        %1494 = vmin.xlane.f32.xlu0 %v1493
        %v1495 = vpop.xlane.xlu0 %1494
        %vm1496 = vcmp.eq.f32.partialorder %v1493, %v1495
        %v1497 = vsel %vm1496, %v1492, inf
        %1498 = vmin.xlane.f32.xlu0 %v1497
        %v1499 = vpop.xlane.xlu0 %1498
        %v1500 = vcvt.f32.s32 %v1499
        %v1501 = vcvt.f32.s32 %v1495
        %v1502 = vshll.u32 %v1501, 16
        %v1503 = vadd.s32 %v1502, %v1500
        %v1504 = vsel %vm202, %v1488, 2147483647
        %v1505 = vand.u32 %v1504, 65535
        %v1506 = vshra.s32 %v1504, 16
        %v1507 = vcvt.s32.f32 %v1505
        %v1508 = vcvt.s32.f32 %v1506
        %1509 = vmin.xlane.f32.xlu0 %v1508
        %v1510 = vpop.xlane.xlu0 %1509
        %vm1511 = vcmp.eq.f32.partialorder %v1508, %v1510
        %v1512 = vsel %vm1511, %v1507, inf
        %1513 = vmin.xlane.f32.xlu0 %v1512
        %v1514 = vpop.xlane.xlu0 %1513
        %v1515 = vcvt.f32.s32 %v1514
        %v1516 = vcvt.f32.s32 %v1510
        %v1517 = vshll.u32 %v1516, 16
        %v1518 = vadd.s32 %v1517, %v1515
        %v1519 = vsel %vm247, %v1518, 2147483647
        %vm1520 = vcmp.lt.s32.totalorder %v1503, %v1519
        %v1521 = vsel %vm1520, %v1503, %v1519
        %v1522 = vrot.slane %v1521, 4
        %vm1523 = vcmp.lt.s32.totalorder %v1521, %v1522
        %v1524 = vsel %vm1523, %v1521, %v1522
        %v1525 = vrot.slane %v1524, 2
        %vm1526 = vcmp.lt.s32.totalorder %v1524, %v1525
        %v1527 = vsel %vm1526, %v1524, %v1525
        %v1528 = vrot.slane %v1527, 1
        %vm1529 = vcmp.lt.s32.totalorder %v1527, %v1528
        %v1530 = vsel %vm1529, %v1527, %v1528
        %v1531 = vsel %vm1485, %v142, 11
        %v1532 = vsel %vm1486, %v142, 11
        %v1533 = vsel %vm198, %v1531, 2147483647
        %v1534 = vand.u32 %v1533, 65535
        %v1535 = vshra.s32 %v1533, 16
        %v1536 = vcvt.s32.f32 %v1534
        %v1537 = vcvt.s32.f32 %v1535
        %1538 = vmin.xlane.f32.xlu0 %v1537
        %v1539 = vpop.xlane.xlu0 %1538
        %vm1540 = vcmp.eq.f32.partialorder %v1537, %v1539
        %v1541 = vsel %vm1540, %v1536, inf
        %1542 = vmin.xlane.f32.xlu0 %v1541
        %v1543 = vpop.xlane.xlu0 %1542
        %v1544 = vcvt.f32.s32 %v1543
        %v1545 = vcvt.f32.s32 %v1539
        %v1546 = vshll.u32 %v1545, 16
        %v1547 = vadd.s32 %v1546, %v1544
        %v1548 = vsel %vm202, %v1532, 2147483647
        %v1549 = vand.u32 %v1548, 65535
        %v1550 = vshra.s32 %v1548, 16
        %v1551 = vcvt.s32.f32 %v1549
        %v1552 = vcvt.s32.f32 %v1550
        %1553 = vmin.xlane.f32.xlu0 %v1552
        %v1554 = vpop.xlane.xlu0 %1553
        %vm1555 = vcmp.eq.f32.partialorder %v1552, %v1554
        %v1556 = vsel %vm1555, %v1551, inf
        %1557 = vmin.xlane.f32.xlu0 %v1556
        %v1558 = vpop.xlane.xlu0 %1557
        %v1559 = vcvt.f32.s32 %v1558
        %v1560 = vcvt.f32.s32 %v1554
        %v1561 = vshll.u32 %v1560, 16
        %v1562 = vadd.s32 %v1561, %v1559
        %v1563 = vsel %vm247, %v1562, 2147483647
        %vm1564 = vcmp.lt.s32.totalorder %v1547, %v1563
        %v1565 = vsel %vm1564, %v1547, %v1563
        %v1566 = vrot.slane %v1565, 4
        %vm1567 = vcmp.lt.s32.totalorder %v1565, %v1566
        %v1568 = vsel %vm1567, %v1565, %v1566
        %v1569 = vrot.slane %v1568, 2
        %vm1570 = vcmp.lt.s32.totalorder %v1568, %v1569
        %v1571 = vsel %vm1570, %v1568, %v1569
        %v1572 = vrot.slane %v1571, 1
        %vm1573 = vcmp.lt.s32.totalorder %v1571, %v1572
        %v1574 = vsel %vm1573, %v1571, %v1572
        %vm1575 = vcmp.eq.s32.totalorder %v139, %v1530
        %vm1576 = vcmp.eq.s32.totalorder %v140, %v1530
        %vm1577 = vcmp.eq.s32.totalorder %v139, %v1574
        %vm1578 = vcmp.eq.s32.totalorder %v140, %v1574
        %v1579 = vsel %vm1575, 1, 0
        %v1580 = vsel %vm1576, 1, 0
        %vm1581 = vcmp.eq.s32.totalorder %v1579, 1
        %vm1582 = vcmp.eq.s32.totalorder %v1580, 1
        %v1583 = vsel %vm1581, %v1351, 0.0
        %v1584 = vsel %vm1582, %v1352, 0.0
        %v1585 = vsel %vm143, %v1583, 0.0
        %v1586 = vsel %vm145, %v1584, 0.0
        %v1587 = vadd.f32 %v1585, %v1586
        %v1588 = vrot.slane %v1587, 4
        %v1589 = vadd.f32 %v1587, %v1588
        %v1590 = vrot.slane %v1589, 2
        %v1591 = vadd.f32 %v1589, %v1590
        %v1592 = vrot.slane %v1591, 1
        %v1593 = vadd.f32 %v1591, %v1592
        %v1594 = vsel %vm1577, 1, 0
        %v1595 = vsel %vm1578, 1, 0
        %vm1596 = vcmp.eq.s32.totalorder %v1594, 1
        %vm1597 = vcmp.eq.s32.totalorder %v1595, 1
        %v1598 = vsel %vm1596, %v1351, 0.0
        %v1599 = vsel %vm1597, %v1352, 0.0
        %v1600 = vsel %vm143, %v1598, 0.0
        %v1601 = vsel %vm145, %v1599, 0.0
        %v1602 = vadd.f32 %v1600, %v1601
        %v1603 = vrot.slane %v1602, 4
        %v1604 = vadd.f32 %v1602, %v1603
        %v1605 = vrot.slane %v1604, 2
        %v1606 = vadd.f32 %v1604, %v1605
        %v1607 = vrot.slane %v1606, 1
        %v1608 = vadd.f32 %v1606, %v1607
        %v1609 = vmul.f32 %v1593, %v162
        %v1610 = vmul.f32 %v1608, %v162
        %v1612 = vrot.slane %v1610, 1
        %v1614 = vadd.f32 %v1609, %v1612
        %v1615 = vadd.f32 %v1614, %v437
        %vm1616 = vcmp.eq.s32.totalorder %v139, 10
        %vm1617 = vcmp.eq.s32.totalorder %v140, 10
        %v1618 = vsel %vm1616, 1, 0
        %v1619 = vsel %vm1617, 1, 0
        %vm1620 = vcmp.eq.s32.totalorder %v1618, 1
        %vm1621 = vcmp.eq.s32.totalorder %v1619, 1
        %v1622 = vperm.slane %v1615, 0
        %v1623 = vsel %vm1620, %v1622, %v1351
        %v1624 = vsel %vm1621, %v1622, %v1352
        %1625 = vst.msk [vmem:[#allocation2] sm:$0xff] %vm143, %v1623
        %1626 = vst.msk [vmem:[#allocation2 + $0x8] sm:$0x7] %vm145, %v1624
        %vm1627 = vmor %vm1575, %vm1577
        %vm1628 = vmor %vm1576, %vm1578
        %v1629 = vld [vmem:[#allocation3] sm:$0xff]
        %v1630 = vld [vmem:[#allocation3 + $0x8] sm:$0x7]
        %v1631 = vsel %vm1616, 0.0, %v1629
        %v1632 = vsel %vm1617, 0.0, %v1630
        %v1633 = vsel %vm1627, inf, %v1631
        %v1634 = vsel %vm1628, inf, %v1632
        %1635 = vst.msk [vmem:[#allocation3] sm:$0xff] %vm154, %v1633
        %1636 = vst.msk [vmem:[#allocation3 + $0x8] sm:$0x7] %vm156, %v1634
        %vm1637 = vcmp.eq.s32.totalorder %v142, %v1530
        %vm1638 = vcmp.eq.s32.totalorder %v142, %v1574
        %vm1639 = vmor %vm1637, %vm1638
        %vm1640 = vcmp.eq.s32.totalorder %v142, 10
        %v1641 = vld [vmem:[#allocation4] sm:$0x1]
        %v1642 = vsel %vm1640, 0.0, %v1641
        %v1643 = vsel %vm1639, inf, %v1642
        %1644 = vst.msk [vmem:[#allocation4] sm:$0x1] %vm160, %v1643
        %v1645 = vld [vmem:[#allocation2 + $0xa] sm:$0x1]
        %vm1646 = vcmask 122880
        %1647 = vst.msk [vmem:[%s133] sm:$0x1] %vm1646, %v1645
        %s1648 = sand.u32 %s71, 1
        %s1649 = scalar_lea.sflag [#allocation6], %s1648
        %s1650 = sand.u32 %s71, 1
        %s1651 = scalar_lea.vmem [#allocation5], %s1650
        // Predicated region
        $region29: #{tpu_custom_call.1} parent=27 // pred_check
          %p1652 = pneg %p81
        $region30: #{tpu_custom_call.1} parent=27 // pred_check_branch
          %1654 = sbr.rel (%p1652) target = $region32
        $region31: #{tpu_custom_call.1} parent=27 // pred_region
          %1656 = vsyncadd %s1649, 0
          %s1657 = scalar_lea.hbm %s2, %s16
          %s1659 = sshll.u32 %s1651, 4
          %s1660 = int_to_ptr.vmem [resolvable:$true] %s1659
          %s1661 = sshll.u32 %s1657, 4
          %s1662 = int_to_ptr.hbm [resolvable:$true] %s1661
          %1664 = dma.vmem_to_hbm [thread:$0]  %s1660, 16, %s1662, %s1649
        $region32: #{tpu_custom_call.1} parent=27 // pred_fallthru
          _
      $region28: #{tpu_custom_call.1} parent=5 // pred_fallthru
        _
      %p1665 = scmp.le.s32.totalorder 2, %s11
      // Predicated region
      $region33: #{tpu_custom_call.1} parent=5 // pred_check
        %p1666 = pneg %p1665
      $region34: #{tpu_custom_call.1} parent=5 // pred_check_branch
        %1668 = sbr.rel (%p1666) target = $region36
      $region35: #{tpu_custom_call.1} parent=5 // pred_region
        %s1669 = ssub.s32 %s11, 2
        // Predicated region
        $region37: #{tpu_custom_call.1} parent=35 // pred_check
          %p1670 = pneg %p87
        $region38: #{tpu_custom_call.1} parent=35 // pred_check_branch
          %1672 = sbr.rel (%p1670) target = $region40
        $region39: #{tpu_custom_call.1} parent=35 // pred_region
          %s1673 = sand.u32 %s72, 1
          %s1674 = scalar_lea.sflag [#allocation6], %s1673
          %s1675 = sand.u32 %s72, 1
          %s1676 = scalar_lea.vmem [#allocation5], %s1675
          %1678 = dma.done %s1674, 16
        $region40: #{tpu_custom_call.1} parent=35 // pred_fallthru
          _
      $region36: #{tpu_custom_call.1} parent=5 // pred_fallthru
        _
    $region6: #{tpu_custom_call.1} parent=1 // loop_footer
      %s15 = sadd.s32 1, %s11
    $region7: #{tpu_custom_call.1} parent=1 // loop_footer_branch
      %10 = sbr.rel target = $region3
    $region8: #{tpu_custom_call.1} parent=1 // loop_exit
      _
    %1679 = vsyncpa [#allocation6], 1
    %s1680 = scalar_lea.sflag [#allocation6], 1
    %1681 = vsyncpa %s1680, 1

</llo_original>
